<compile_context>
chip_gen: v7x
topology: tpu7x:2x2x1
jax: 0.10.0
libtpu: 0.0.40
codegen_flags: <defaults>
</compile_context>

<pallas_src>
import functools

import jax
import jax.numpy as jnp
from jax import lax
from jax.experimental import pallas as pl
from jax.experimental.pallas import tpu as pltpu


# ----------------------------- Pallas kernel --------------------------------
def gru_pool_kernel(gi_r_ref, gi_z_ref, gi_n_ref, whh_ref, bhh_n_ref, out_ref):
    """Fused GRU recurrence + tanh + max-pool over time (single grid step).

    gi_r_ref / gi_z_ref / gi_n_ref : (T, B, H) precomputed per-gate input terms
        gi_r = x_t @ W_ih_r + b_ih_r + b_hh_r   (r/z recurrent biases folded)
        gi_z = x_t @ W_ih_z + b_ih_z + b_hh_z
        gi_n = x_t @ W_ih_n + b_ih_n            (b_hh_n must stay separate)
    whh_ref   : (3, H, H) per-gate recurrent weights, transposed (gate order r,z,n)
    bhh_n_ref : (1, H)    recurrent bias of the n gate
    out_ref   : (B, H)    max_t tanh(h_t)
    """
    T = gi_r_ref.shape[0]
    B, H = out_ref.shape

    whh_r = whh_ref[0]          # (H, H)
    whh_z = whh_ref[1]
    whh_n = whh_ref[2]
    bhh_n = bhh_n_ref[...]      # (1, H)

    def step(t, carry):
        h, mx = carry
        r = jax.nn.sigmoid(
            gi_r_ref[t] + jnp.dot(h, whh_r, preferred_element_type=jnp.float32))
        z = jax.nn.sigmoid(
            gi_z_ref[t] + jnp.dot(h, whh_z, preferred_element_type=jnp.float32))
        n = jnp.tanh(
            gi_n_ref[t]
            + r * (jnp.dot(h, whh_n, preferred_element_type=jnp.float32) + bhh_n))
        h_new = (1.0 - z) * n + z * h
        mx_new = jnp.maximum(mx, jnp.tanh(h_new))
        return h_new, mx_new

    h0 = jnp.zeros((B, H), jnp.float32)
    mx0 = jnp.full((B, H), -jnp.inf, jnp.float32)
    _, mx = lax.fori_loop(0, T, step, (h0, mx0), unroll=True)

    out_ref[...] = mx.astype(out_ref.dtype)


def gru_pool_pallas(gi_r, gi_z, gi_n, whh_stack, bhh_n):
    """gi_*: (T, B, H) f32; whh_stack: (3, H, H); bhh_n: (1, H). Returns (B, H)."""
    T, B, H = gi_r.shape

    grid_spec = pltpu.PrefetchScalarGridSpec(
        num_scalar_prefetch=0,
        grid=(1,),
        in_specs=[
            pl.BlockSpec((T, B, H), lambda i: (0, 0, 0)),   # gi_r (whole array)
            pl.BlockSpec((T, B, H), lambda i: (0, 0, 0)),   # gi_z
            pl.BlockSpec((T, B, H), lambda i: (0, 0, 0)),   # gi_n
            pl.BlockSpec((3, H, H), lambda i: (0, 0, 0)),   # W_hh per gate
            pl.BlockSpec((1, H), lambda i: (0, 0)),         # b_hh_n
        ],
        out_specs=pl.BlockSpec((B, H), lambda i: (0, 0)),
    )

    return pl.pallas_call(
        gru_pool_kernel,
        out_shape=jax.ShapeDtypeStruct((B, H), jnp.float32),
        grid_spec=grid_spec,
        compiler_params=pltpu.CompilerParams(
            dimension_semantics=("arbitrary",)),
    )(gi_r, gi_z, gi_n, whh_stack, bhh_n)


# --------------------------- JAX glue / wrapper ------------------------------
def renorm_embedding(emb, max_norm):
    # nn.Embedding(max_norm=...) renormalizes rows whose L2 norm exceeds max_norm.
    norms = jnp.linalg.norm(emb, axis=1, keepdims=True)
    scale = jnp.minimum(1.0, max_norm / jnp.maximum(norms, 1e-7))
    return emb * scale


@functools.partial(jax.jit, static_argnames=("max_norm",))
def model_forward(tokens, params, max_norm):
    emb = renorm_embedding(params["embedding"], max_norm)
    x = jnp.take(emb, tokens, axis=0)          # (B, T, E)
    # TODO(synk): nn.Dropout is identity at inference; training-mode dropout not applied.

    H = params["whh_t"].shape[0]
    bhh = params["bhh"][0]

    # Hoisted input projection: one (B*T, E) @ (E, 3H) matmul for all time steps.
    gi = jnp.einsum("bte,eg->btg", x, params["wih_t"],
                    preferred_element_type=jnp.float32) + params["bih"][0]  # (B,T,3H)

    # Fold recurrent r/z biases here; keep b_hh_n separate (n gate: r*(h@W+b_hh_n)).
    gi_r = jnp.transpose(gi[..., 0:H] + bhh[0:H], (1, 0, 2))           # (T, B, H)
    gi_z = jnp.transpose(gi[..., H:2 * H] + bhh[H:2 * H], (1, 0, 2))   # (T, B, H)
    gi_n = jnp.transpose(gi[..., 2 * H:3 * H], (1, 0, 2))              # (T, B, H)

    whh_t = params["whh_t"]                                            # (H, 3H)
    whh_stack = jnp.stack(
        [whh_t[:, 0:H], whh_t[:, H:2 * H], whh_t[:, 2 * H:3 * H]], axis=0)  # (3,H,H)
    bhh_n = bhh[2 * H:3 * H][None, :]                                  # (1, H)

    pooled = gru_pool_pallas(gi_r, gi_z, gi_n, whh_stack, bhh_n)       # (B, H)

    # Final classifier (C=4) stays in XLA to avoid a 4-lane masked-store output.
    return pooled @ params["wout_t"] + params["bout"][0]


# Pure-JAX reference (mirrors PyTorch nn.GRU semantics) for a sanity check.
def reference_forward(tokens, params, max_norm):
    emb = renorm_embedding(params["embedding"], max_norm)
    x = jnp.take(emb, tokens, axis=0)          # (B, T, E)
    B, T, E = x.shape
    H = params["whh_t"].shape[0]
    wih_t, whh_t = params["wih_t"], params["whh_t"]
    bih, bhh = params["bih"][0], params["bhh"][0]

    def step(h, x_t):
        gi = x_t @ wih_t + bih
        gh = h @ whh_t + bhh
        i_r, i_z, i_n = gi[:, :H], gi[:, H:2 * H], gi[:, 2 * H:]
        h_r, h_z, h_n = gh[:, :H], gh[:, H:2 * H], gh[:, 2 * H:]
        r = jax.nn.sigmoid(i_r + h_r)
        z = jax.nn.sigmoid(i_z + h_z)
        n = jnp.tanh(i_n + r * h_n)
        h_new = (1.0 - z) * n + z * h
        return h_new, h_new

    h0 = jnp.zeros((B, H), jnp.float32)
    _, hs = lax.scan(step, h0, jnp.transpose(x, (1, 0, 2)))  # (T, B, H)
    pooled = jnp.max(jnp.tanh(hs), axis=0)                   # (B, H)
    return pooled @ params["wout_t"] + params["bout"][0]


def init_params(key, embed_num, embed_dim, hidden, class_num):
    ks = jax.random.split(key, 8)
    bound = 1.0 / jnp.sqrt(hidden)
    u = lambda k, shape, b: jax.random.uniform(k, shape, jnp.float32, -b, b)
    return {
        "embedding": jax.random.normal(ks[0], (embed_num, embed_dim), jnp.float32),
        # stored transposed: (E, 3H), (H, 3H), gate order r, z, n
        "wih_t": u(ks[1], (embed_dim, 3 * hidden), bound),
        "whh_t": u(ks[2], (hidden, 3 * hidden), bound),
        "bih": u(ks[3], (1, 3 * hidden), bound),
        "bhh": u(ks[4], (1, 3 * hidden), bound),
        "wout_t": u(ks[5], (hidden, class_num), bound),
        "bout": u(ks[6], (1, class_num), bound),
    }


if __name__ == "__main__":
    # Small, deterministic configuration.
    B, T = 2, 8
    embed_num, embed_dim = 100, 32   # args.input_size == args.embed_dim == 32
    hidden, class_num = 32, 4
    max_norm = 5.0

    key = jax.random.PRNGKey(0)
    k_tok, k_par = jax.random.split(key)
    tokens = jax.random.randint(k_tok, (B, T), 0, embed_num, dtype=jnp.int32)
    params = init_params(k_par, embed_num, embed_dim, hidden, class_num)

    out = model_forward(tokens, params, max_norm)
    out = jax.block_until_ready(out)

    ref = reference_forward(tokens, params, max_norm)
    assert out.shape == (B, class_num)
    assert jnp.allclose(out, ref, atol=1e-4, rtol=1e-4), (out, ref)

    print("KERNEL_OK")
</pallas_src>

<mosaic_0001>
module attributes {stable_mosaic.version = 11 : i64} {
  func.func @gru_pool_kernel(%arg0: i32, %arg1: memref<8x2x32xf32, #tpu.memory_space<vmem>>, %arg2: memref<8x2x32xf32, #tpu.memory_space<vmem>>, %arg3: memref<8x2x32xf32, #tpu.memory_space<vmem>>, %arg4: memref<3x32x32xf32, #tpu.memory_space<vmem>>, %arg5: memref<1x32xf32, #tpu.memory_space<vmem>>, %arg6: memref<2x32xf32, #tpu.memory_space<vmem>>) attributes {dimension_semantics = [#tpu.dimension_semantics<arbitrary>], iteration_bounds = array<i64: 1>, scalar_prefetch = 0 : i64, scratch_operands = 0 : i64, tpu.core_type = #tpu.core_type<tc>, window_params = [{pipeline_mode = #tpu.pipeline_mode<synchronous>, transform_indices = @transform_0, window_bounds = array<i64: 8, 2, 32>}, {pipeline_mode = #tpu.pipeline_mode<synchronous>, transform_indices = @transform_1, window_bounds = array<i64: 8, 2, 32>}, {pipeline_mode = #tpu.pipeline_mode<synchronous>, transform_indices = @transform_2, window_bounds = array<i64: 8, 2, 32>}, {pipeline_mode = #tpu.pipeline_mode<synchronous>, transform_indices = @transform_3, window_bounds = array<i64: 3, 32, 32>}, {pipeline_mode = #tpu.pipeline_mode<synchronous>, transform_indices = @transform_4, window_bounds = array<i64: 1, 32>}, {pipeline_mode = #tpu.pipeline_mode<synchronous>, transform_indices = @transform_5, window_bounds = array<i64: 2, 32>}]} {
    %c0 = arith.constant 0 : index
    %c0_0 = arith.constant 0 : index
    %c0_1 = arith.constant 0 : index
    %0 = vector.load %arg4[%c0, %c0_0, %c0_1] : memref<3x32x32xf32, #tpu.memory_space<vmem>>, vector<1x32x32xf32>
    %1 = vector.shape_cast %0 : vector<1x32x32xf32> to vector<32x32xf32>
    %c1 = arith.constant 1 : index
    %c0_2 = arith.constant 0 : index
    %c0_3 = arith.constant 0 : index
    %2 = vector.load %arg4[%c1, %c0_2, %c0_3] : memref<3x32x32xf32, #tpu.memory_space<vmem>>, vector<1x32x32xf32>
    %3 = vector.shape_cast %2 : vector<1x32x32xf32> to vector<32x32xf32>
    %c2 = arith.constant 2 : index
    %c0_4 = arith.constant 0 : index
    %c0_5 = arith.constant 0 : index
    %4 = vector.load %arg4[%c2, %c0_4, %c0_5] : memref<3x32x32xf32, #tpu.memory_space<vmem>>, vector<1x32x32xf32>
    %5 = vector.shape_cast %4 : vector<1x32x32xf32> to vector<32x32xf32>
    %c0_6 = arith.constant 0 : index
    %c0_7 = arith.constant 0 : index
    %6 = vector.load %arg5[%c0_6, %c0_7] : memref<1x32xf32, #tpu.memory_space<vmem>>, vector<1x32xf32>
    %cst = arith.constant 0.000000e+00 : f32
    %7 = vector.broadcast %cst : f32 to vector<2x32xf32>
    %cst_8 = arith.constant 0xFF800000 : f32
    %8 = vector.broadcast %cst_8 : f32 to vector<2x32xf32>
    %c0_i32 = arith.constant 0 : i32
    %9 = arith.index_cast %c0_i32 : i32 to index
    %c0_9 = arith.constant 0 : index
    %c0_10 = arith.constant 0 : index
    %10 = vector.load %arg1[%9, %c0_9, %c0_10] : memref<8x2x32xf32, #tpu.memory_space<vmem>>, vector<1x2x32xf32>
    %11 = vector.shape_cast %10 : vector<1x2x32xf32> to vector<2x32xf32>
    %cst_11 = arith.constant dense<0.000000e+00> : vector<2x32xf32>
    %12 = tpu.matmul %7, %1, %cst_11 {dimension_numbers = #tpu.dot_dimension_numbers<[1], [0], [0], [1], [0, 0, 1, 1], [], []>} : vector<2x32xf32>, vector<32x32xf32>, vector<2x32xf32> -> vector<2x32xf32>
    %13 = arith.addf %11, %12 : vector<2x32xf32>
    %14 = arith.negf %13 : vector<2x32xf32>
    %15 = math.exp %14 : vector<2x32xf32>
    %cst_12 = arith.constant 1.000000e+00 : f32
    %16 = vector.broadcast %cst_12 : f32 to vector<2x32xf32>
    %17 = arith.addf %16, %15 : vector<2x32xf32>
    %18 = arith.divf %16, %17 : vector<2x32xf32>
    %19 = arith.index_cast %c0_i32 : i32 to index
    %c0_13 = arith.constant 0 : index
    %c0_14 = arith.constant 0 : index
    %20 = vector.load %arg2[%19, %c0_13, %c0_14] : memref<8x2x32xf32, #tpu.memory_space<vmem>>, vector<1x2x32xf32>
    %21 = vector.shape_cast %20 : vector<1x2x32xf32> to vector<2x32xf32>
    %cst_15 = arith.constant dense<0.000000e+00> : vector<2x32xf32>
    %22 = tpu.matmul %7, %3, %cst_15 {dimension_numbers = #tpu.dot_dimension_numbers<[1], [0], [0], [1], [0, 0, 1, 1], [], []>} : vector<2x32xf32>, vector<32x32xf32>, vector<2x32xf32> -> vector<2x32xf32>
    %23 = arith.addf %21, %22 : vector<2x32xf32>
    %24 = arith.negf %23 : vector<2x32xf32>
    %25 = math.exp %24 : vector<2x32xf32>
    %cst_16 = arith.constant 1.000000e+00 : f32
    %26 = vector.broadcast %cst_16 : f32 to vector<2x32xf32>
    %27 = arith.addf %26, %25 : vector<2x32xf32>
    %28 = arith.divf %26, %27 : vector<2x32xf32>
    %29 = arith.index_cast %c0_i32 : i32 to index
    %c0_17 = arith.constant 0 : index
    %c0_18 = arith.constant 0 : index
    %30 = vector.load %arg3[%29, %c0_17, %c0_18] : memref<8x2x32xf32, #tpu.memory_space<vmem>>, vector<1x2x32xf32>
    %31 = vector.shape_cast %30 : vector<1x2x32xf32> to vector<2x32xf32>
    %cst_19 = arith.constant dense<0.000000e+00> : vector<2x32xf32>
    %32 = tpu.matmul %7, %5, %cst_19 {dimension_numbers = #tpu.dot_dimension_numbers<[1], [0], [0], [1], [0, 0, 1, 1], [], []>} : vector<2x32xf32>, vector<32x32xf32>, vector<2x32xf32> -> vector<2x32xf32>
    %33 = vector.broadcast %6 : vector<1x32xf32> to vector<2x32xf32>
    %34 = arith.addf %32, %33 : vector<2x32xf32>
    %35 = arith.mulf %18, %34 : vector<2x32xf32>
    %36 = arith.addf %31, %35 : vector<2x32xf32>
    %37 = math.tanh %36 : vector<2x32xf32>
    %cst_20 = arith.constant 1.000000e+00 : f32
    %38 = vector.broadcast %cst_20 : f32 to vector<2x32xf32>
    %39 = arith.subf %38, %28 : vector<2x32xf32>
    %40 = arith.mulf %39, %37 : vector<2x32xf32>
    %41 = arith.mulf %28, %7 : vector<2x32xf32>
    %42 = arith.addf %40, %41 : vector<2x32xf32>
    %43 = math.tanh %42 : vector<2x32xf32>
    %44 = arith.maximumf %8, %43 : vector<2x32xf32>
    %c1_i32 = arith.constant 1 : i32
    %45 = arith.index_cast %c1_i32 : i32 to index
    %c0_21 = arith.constant 0 : index
    %c0_22 = arith.constant 0 : index
    %46 = vector.load %arg1[%45, %c0_21, %c0_22] : memref<8x2x32xf32, #tpu.memory_space<vmem>>, vector<1x2x32xf32>
    %47 = vector.shape_cast %46 : vector<1x2x32xf32> to vector<2x32xf32>
    %cst_23 = arith.constant dense<0.000000e+00> : vector<2x32xf32>
    %48 = tpu.matmul %42, %1, %cst_23 {dimension_numbers = #tpu.dot_dimension_numbers<[1], [0], [0], [1], [0, 0, 1, 1], [], []>} : vector<2x32xf32>, vector<32x32xf32>, vector<2x32xf32> -> vector<2x32xf32>
    %49 = arith.addf %47, %48 : vector<2x32xf32>
    %50 = arith.negf %49 : vector<2x32xf32>
    %51 = math.exp %50 : vector<2x32xf32>
    %cst_24 = arith.constant 1.000000e+00 : f32
    %52 = vector.broadcast %cst_24 : f32 to vector<2x32xf32>
    %53 = arith.addf %52, %51 : vector<2x32xf32>
    %54 = arith.divf %52, %53 : vector<2x32xf32>
    %55 = arith.index_cast %c1_i32 : i32 to index
    %c0_25 = arith.constant 0 : index
    %c0_26 = arith.constant 0 : index
    %56 = vector.load %arg2[%55, %c0_25, %c0_26] : memref<8x2x32xf32, #tpu.memory_space<vmem>>, vector<1x2x32xf32>
    %57 = vector.shape_cast %56 : vector<1x2x32xf32> to vector<2x32xf32>
    %cst_27 = arith.constant dense<0.000000e+00> : vector<2x32xf32>
    %58 = tpu.matmul %42, %3, %cst_27 {dimension_numbers = #tpu.dot_dimension_numbers<[1], [0], [0], [1], [0, 0, 1, 1], [], []>} : vector<2x32xf32>, vector<32x32xf32>, vector<2x32xf32> -> vector<2x32xf32>
    %59 = arith.addf %57, %58 : vector<2x32xf32>
    %60 = arith.negf %59 : vector<2x32xf32>
    %61 = math.exp %60 : vector<2x32xf32>
    %cst_28 = arith.constant 1.000000e+00 : f32
    %62 = vector.broadcast %cst_28 : f32 to vector<2x32xf32>
    %63 = arith.addf %62, %61 : vector<2x32xf32>
    %64 = arith.divf %62, %63 : vector<2x32xf32>
    %65 = arith.index_cast %c1_i32 : i32 to index
    %c0_29 = arith.constant 0 : index
    %c0_30 = arith.constant 0 : index
    %66 = vector.load %arg3[%65, %c0_29, %c0_30] : memref<8x2x32xf32, #tpu.memory_space<vmem>>, vector<1x2x32xf32>
    %67 = vector.shape_cast %66 : vector<1x2x32xf32> to vector<2x32xf32>
    %cst_31 = arith.constant dense<0.000000e+00> : vector<2x32xf32>
    %68 = tpu.matmul %42, %5, %cst_31 {dimension_numbers = #tpu.dot_dimension_numbers<[1], [0], [0], [1], [0, 0, 1, 1], [], []>} : vector<2x32xf32>, vector<32x32xf32>, vector<2x32xf32> -> vector<2x32xf32>
    %69 = vector.broadcast %6 : vector<1x32xf32> to vector<2x32xf32>
    %70 = arith.addf %68, %69 : vector<2x32xf32>
    %71 = arith.mulf %54, %70 : vector<2x32xf32>
    %72 = arith.addf %67, %71 : vector<2x32xf32>
    %73 = math.tanh %72 : vector<2x32xf32>
    %cst_32 = arith.constant 1.000000e+00 : f32
    %74 = vector.broadcast %cst_32 : f32 to vector<2x32xf32>
    %75 = arith.subf %74, %64 : vector<2x32xf32>
    %76 = arith.mulf %75, %73 : vector<2x32xf32>
    %77 = arith.mulf %64, %42 : vector<2x32xf32>
    %78 = arith.addf %76, %77 : vector<2x32xf32>
    %79 = math.tanh %78 : vector<2x32xf32>
    %80 = arith.maximumf %44, %79 : vector<2x32xf32>
    %c2_i32 = arith.constant 2 : i32
    %81 = arith.index_cast %c2_i32 : i32 to index
    %c0_33 = arith.constant 0 : index
    %c0_34 = arith.constant 0 : index
    %82 = vector.load %arg1[%81, %c0_33, %c0_34] : memref<8x2x32xf32, #tpu.memory_space<vmem>>, vector<1x2x32xf32>
    %83 = vector.shape_cast %82 : vector<1x2x32xf32> to vector<2x32xf32>
    %cst_35 = arith.constant dense<0.000000e+00> : vector<2x32xf32>
    %84 = tpu.matmul %78, %1, %cst_35 {dimension_numbers = #tpu.dot_dimension_numbers<[1], [0], [0], [1], [0, 0, 1, 1], [], []>} : vector<2x32xf32>, vector<32x32xf32>, vector<2x32xf32> -> vector<2x32xf32>
    %85 = arith.addf %83, %84 : vector<2x32xf32>
    %86 = arith.negf %85 : vector<2x32xf32>
    %87 = math.exp %86 : vector<2x32xf32>
    %cst_36 = arith.constant 1.000000e+00 : f32
    %88 = vector.broadcast %cst_36 : f32 to vector<2x32xf32>
    %89 = arith.addf %88, %87 : vector<2x32xf32>
    %90 = arith.divf %88, %89 : vector<2x32xf32>
    %91 = arith.index_cast %c2_i32 : i32 to index
    %c0_37 = arith.constant 0 : index
    %c0_38 = arith.constant 0 : index
    %92 = vector.load %arg2[%91, %c0_37, %c0_38] : memref<8x2x32xf32, #tpu.memory_space<vmem>>, vector<1x2x32xf32>
    %93 = vector.shape_cast %92 : vector<1x2x32xf32> to vector<2x32xf32>
    %cst_39 = arith.constant dense<0.000000e+00> : vector<2x32xf32>
    %94 = tpu.matmul %78, %3, %cst_39 {dimension_numbers = #tpu.dot_dimension_numbers<[1], [0], [0], [1], [0, 0, 1, 1], [], []>} : vector<2x32xf32>, vector<32x32xf32>, vector<2x32xf32> -> vector<2x32xf32>
    %95 = arith.addf %93, %94 : vector<2x32xf32>
    %96 = arith.negf %95 : vector<2x32xf32>
    %97 = math.exp %96 : vector<2x32xf32>
    %cst_40 = arith.constant 1.000000e+00 : f32
    %98 = vector.broadcast %cst_40 : f32 to vector<2x32xf32>
    %99 = arith.addf %98, %97 : vector<2x32xf32>
    %100 = arith.divf %98, %99 : vector<2x32xf32>
    %101 = arith.index_cast %c2_i32 : i32 to index
    %c0_41 = arith.constant 0 : index
    %c0_42 = arith.constant 0 : index
    %102 = vector.load %arg3[%101, %c0_41, %c0_42] : memref<8x2x32xf32, #tpu.memory_space<vmem>>, vector<1x2x32xf32>
    %103 = vector.shape_cast %102 : vector<1x2x32xf32> to vector<2x32xf32>
    %cst_43 = arith.constant dense<0.000000e+00> : vector<2x32xf32>
    %104 = tpu.matmul %78, %5, %cst_43 {dimension_numbers = #tpu.dot_dimension_numbers<[1], [0], [0], [1], [0, 0, 1, 1], [], []>} : vector<2x32xf32>, vector<32x32xf32>, vector<2x32xf32> -> vector<2x32xf32>
    %105 = vector.broadcast %6 : vector<1x32xf32> to vector<2x32xf32>
    %106 = arith.addf %104, %105 : vector<2x32xf32>
    %107 = arith.mulf %90, %106 : vector<2x32xf32>
    %108 = arith.addf %103, %107 : vector<2x32xf32>
    %109 = math.tanh %108 : vector<2x32xf32>
    %cst_44 = arith.constant 1.000000e+00 : f32
    %110 = vector.broadcast %cst_44 : f32 to vector<2x32xf32>
    %111 = arith.subf %110, %100 : vector<2x32xf32>
    %112 = arith.mulf %111, %109 : vector<2x32xf32>
    %113 = arith.mulf %100, %78 : vector<2x32xf32>
    %114 = arith.addf %112, %113 : vector<2x32xf32>
    %115 = math.tanh %114 : vector<2x32xf32>
    %116 = arith.maximumf %80, %115 : vector<2x32xf32>
    %c3_i32 = arith.constant 3 : i32
    %117 = arith.index_cast %c3_i32 : i32 to index
    %c0_45 = arith.constant 0 : index
    %c0_46 = arith.constant 0 : index
    %118 = vector.load %arg1[%117, %c0_45, %c0_46] : memref<8x2x32xf32, #tpu.memory_space<vmem>>, vector<1x2x32xf32>
    %119 = vector.shape_cast %118 : vector<1x2x32xf32> to vector<2x32xf32>
    %cst_47 = arith.constant dense<0.000000e+00> : vector<2x32xf32>
    %120 = tpu.matmul %114, %1, %cst_47 {dimension_numbers = #tpu.dot_dimension_numbers<[1], [0], [0], [1], [0, 0, 1, 1], [], []>} : vector<2x32xf32>, vector<32x32xf32>, vector<2x32xf32> -> vector<2x32xf32>
    %121 = arith.addf %119, %120 : vector<2x32xf32>
    %122 = arith.negf %121 : vector<2x32xf32>
    %123 = math.exp %122 : vector<2x32xf32>
    %cst_48 = arith.constant 1.000000e+00 : f32
    %124 = vector.broadcast %cst_48 : f32 to vector<2x32xf32>
    %125 = arith.addf %124, %123 : vector<2x32xf32>
    %126 = arith.divf %124, %125 : vector<2x32xf32>
    %127 = arith.index_cast %c3_i32 : i32 to index
    %c0_49 = arith.constant 0 : index
    %c0_50 = arith.constant 0 : index
    %128 = vector.load %arg2[%127, %c0_49, %c0_50] : memref<8x2x32xf32, #tpu.memory_space<vmem>>, vector<1x2x32xf32>
    %129 = vector.shape_cast %128 : vector<1x2x32xf32> to vector<2x32xf32>
    %cst_51 = arith.constant dense<0.000000e+00> : vector<2x32xf32>
    %130 = tpu.matmul %114, %3, %cst_51 {dimension_numbers = #tpu.dot_dimension_numbers<[1], [0], [0], [1], [0, 0, 1, 1], [], []>} : vector<2x32xf32>, vector<32x32xf32>, vector<2x32xf32> -> vector<2x32xf32>
    %131 = arith.addf %129, %130 : vector<2x32xf32>
    %132 = arith.negf %131 : vector<2x32xf32>
    %133 = math.exp %132 : vector<2x32xf32>
    %cst_52 = arith.constant 1.000000e+00 : f32
    %134 = vector.broadcast %cst_52 : f32 to vector<2x32xf32>
    %135 = arith.addf %134, %133 : vector<2x32xf32>
    %136 = arith.divf %134, %135 : vector<2x32xf32>
    %137 = arith.index_cast %c3_i32 : i32 to index
    %c0_53 = arith.constant 0 : index
    %c0_54 = arith.constant 0 : index
    %138 = vector.load %arg3[%137, %c0_53, %c0_54] : memref<8x2x32xf32, #tpu.memory_space<vmem>>, vector<1x2x32xf32>
    %139 = vector.shape_cast %138 : vector<1x2x32xf32> to vector<2x32xf32>
    %cst_55 = arith.constant dense<0.000000e+00> : vector<2x32xf32>
    %140 = tpu.matmul %114, %5, %cst_55 {dimension_numbers = #tpu.dot_dimension_numbers<[1], [0], [0], [1], [0, 0, 1, 1], [], []>} : vector<2x32xf32>, vector<32x32xf32>, vector<2x32xf32> -> vector<2x32xf32>
    %141 = vector.broadcast %6 : vector<1x32xf32> to vector<2x32xf32>
    %142 = arith.addf %140, %141 : vector<2x32xf32>
    %143 = arith.mulf %126, %142 : vector<2x32xf32>
    %144 = arith.addf %139, %143 : vector<2x32xf32>
    %145 = math.tanh %144 : vector<2x32xf32>
    %cst_56 = arith.constant 1.000000e+00 : f32
    %146 = vector.broadcast %cst_56 : f32 to vector<2x32xf32>
    %147 = arith.subf %146, %136 : vector<2x32xf32>
    %148 = arith.mulf %147, %145 : vector<2x32xf32>
    %149 = arith.mulf %136, %114 : vector<2x32xf32>
    %150 = arith.addf %148, %149 : vector<2x32xf32>
    %151 = math.tanh %150 : vector<2x32xf32>
    %152 = arith.maximumf %116, %151 : vector<2x32xf32>
    %c4_i32 = arith.constant 4 : i32
    %153 = arith.index_cast %c4_i32 : i32 to index
    %c0_57 = arith.constant 0 : index
    %c0_58 = arith.constant 0 : index
    %154 = vector.load %arg1[%153, %c0_57, %c0_58] : memref<8x2x32xf32, #tpu.memory_space<vmem>>, vector<1x2x32xf32>
    %155 = vector.shape_cast %154 : vector<1x2x32xf32> to vector<2x32xf32>
    %cst_59 = arith.constant dense<0.000000e+00> : vector<2x32xf32>
    %156 = tpu.matmul %150, %1, %cst_59 {dimension_numbers = #tpu.dot_dimension_numbers<[1], [0], [0], [1], [0, 0, 1, 1], [], []>} : vector<2x32xf32>, vector<32x32xf32>, vector<2x32xf32> -> vector<2x32xf32>
    %157 = arith.addf %155, %156 : vector<2x32xf32>
    %158 = arith.negf %157 : vector<2x32xf32>
    %159 = math.exp %158 : vector<2x32xf32>
    %cst_60 = arith.constant 1.000000e+00 : f32
    %160 = vector.broadcast %cst_60 : f32 to vector<2x32xf32>
    %161 = arith.addf %160, %159 : vector<2x32xf32>
    %162 = arith.divf %160, %161 : vector<2x32xf32>
    %163 = arith.index_cast %c4_i32 : i32 to index
    %c0_61 = arith.constant 0 : index
    %c0_62 = arith.constant 0 : index
    %164 = vector.load %arg2[%163, %c0_61, %c0_62] : memref<8x2x32xf32, #tpu.memory_space<vmem>>, vector<1x2x32xf32>
    %165 = vector.shape_cast %164 : vector<1x2x32xf32> to vector<2x32xf32>
    %cst_63 = arith.constant dense<0.000000e+00> : vector<2x32xf32>
    %166 = tpu.matmul %150, %3, %cst_63 {dimension_numbers = #tpu.dot_dimension_numbers<[1], [0], [0], [1], [0, 0, 1, 1], [], []>} : vector<2x32xf32>, vector<32x32xf32>, vector<2x32xf32> -> vector<2x32xf32>
    %167 = arith.addf %165, %166 : vector<2x32xf32>
    %168 = arith.negf %167 : vector<2x32xf32>
    %169 = math.exp %168 : vector<2x32xf32>
    %cst_64 = arith.constant 1.000000e+00 : f32
    %170 = vector.broadcast %cst_64 : f32 to vector<2x32xf32>
    %171 = arith.addf %170, %169 : vector<2x32xf32>
    %172 = arith.divf %170, %171 : vector<2x32xf32>
    %173 = arith.index_cast %c4_i32 : i32 to index
    %c0_65 = arith.constant 0 : index
    %c0_66 = arith.constant 0 : index
    %174 = vector.load %arg3[%173, %c0_65, %c0_66] : memref<8x2x32xf32, #tpu.memory_space<vmem>>, vector<1x2x32xf32>
    %175 = vector.shape_cast %174 : vector<1x2x32xf32> to vector<2x32xf32>
    %cst_67 = arith.constant dense<0.000000e+00> : vector<2x32xf32>
    %176 = tpu.matmul %150, %5, %cst_67 {dimension_numbers = #tpu.dot_dimension_numbers<[1], [0], [0], [1], [0, 0, 1, 1], [], []>} : vector<2x32xf32>, vector<32x32xf32>, vector<2x32xf32> -> vector<2x32xf32>
    %177 = vector.broadcast %6 : vector<1x32xf32> to vector<2x32xf32>
    %178 = arith.addf %176, %177 : vector<2x32xf32>
    %179 = arith.mulf %162, %178 : vector<2x32xf32>
    %180 = arith.addf %175, %179 : vector<2x32xf32>
    %181 = math.tanh %180 : vector<2x32xf32>
    %cst_68 = arith.constant 1.000000e+00 : f32
    %182 = vector.broadcast %cst_68 : f32 to vector<2x32xf32>
    %183 = arith.subf %182, %172 : vector<2x32xf32>
    %184 = arith.mulf %183, %181 : vector<2x32xf32>
    %185 = arith.mulf %172, %150 : vector<2x32xf32>
    %186 = arith.addf %184, %185 : vector<2x32xf32>
    %187 = math.tanh %186 : vector<2x32xf32>
    %188 = arith.maximumf %152, %187 : vector<2x32xf32>
    %c5_i32 = arith.constant 5 : i32
    %189 = arith.index_cast %c5_i32 : i32 to index
    %c0_69 = arith.constant 0 : index
    %c0_70 = arith.constant 0 : index
    %190 = vector.load %arg1[%189, %c0_69, %c0_70] : memref<8x2x32xf32, #tpu.memory_space<vmem>>, vector<1x2x32xf32>
    %191 = vector.shape_cast %190 : vector<1x2x32xf32> to vector<2x32xf32>
    %cst_71 = arith.constant dense<0.000000e+00> : vector<2x32xf32>
    %192 = tpu.matmul %186, %1, %cst_71 {dimension_numbers = #tpu.dot_dimension_numbers<[1], [0], [0], [1], [0, 0, 1, 1], [], []>} : vector<2x32xf32>, vector<32x32xf32>, vector<2x32xf32> -> vector<2x32xf32>
    %193 = arith.addf %191, %192 : vector<2x32xf32>
    %194 = arith.negf %193 : vector<2x32xf32>
    %195 = math.exp %194 : vector<2x32xf32>
    %cst_72 = arith.constant 1.000000e+00 : f32
    %196 = vector.broadcast %cst_72 : f32 to vector<2x32xf32>
    %197 = arith.addf %196, %195 : vector<2x32xf32>
    %198 = arith.divf %196, %197 : vector<2x32xf32>
    %199 = arith.index_cast %c5_i32 : i32 to index
    %c0_73 = arith.constant 0 : index
    %c0_74 = arith.constant 0 : index
    %200 = vector.load %arg2[%199, %c0_73, %c0_74] : memref<8x2x32xf32, #tpu.memory_space<vmem>>, vector<1x2x32xf32>
    %201 = vector.shape_cast %200 : vector<1x2x32xf32> to vector<2x32xf32>
    %cst_75 = arith.constant dense<0.000000e+00> : vector<2x32xf32>
    %202 = tpu.matmul %186, %3, %cst_75 {dimension_numbers = #tpu.dot_dimension_numbers<[1], [0], [0], [1], [0, 0, 1, 1], [], []>} : vector<2x32xf32>, vector<32x32xf32>, vector<2x32xf32> -> vector<2x32xf32>
    %203 = arith.addf %201, %202 : vector<2x32xf32>
    %204 = arith.negf %203 : vector<2x32xf32>
    %205 = math.exp %204 : vector<2x32xf32>
    %cst_76 = arith.constant 1.000000e+00 : f32
    %206 = vector.broadcast %cst_76 : f32 to vector<2x32xf32>
    %207 = arith.addf %206, %205 : vector<2x32xf32>
    %208 = arith.divf %206, %207 : vector<2x32xf32>
    %209 = arith.index_cast %c5_i32 : i32 to index
    %c0_77 = arith.constant 0 : index
    %c0_78 = arith.constant 0 : index
    %210 = vector.load %arg3[%209, %c0_77, %c0_78] : memref<8x2x32xf32, #tpu.memory_space<vmem>>, vector<1x2x32xf32>
    %211 = vector.shape_cast %210 : vector<1x2x32xf32> to vector<2x32xf32>
    %cst_79 = arith.constant dense<0.000000e+00> : vector<2x32xf32>
    %212 = tpu.matmul %186, %5, %cst_79 {dimension_numbers = #tpu.dot_dimension_numbers<[1], [0], [0], [1], [0, 0, 1, 1], [], []>} : vector<2x32xf32>, vector<32x32xf32>, vector<2x32xf32> -> vector<2x32xf32>
    %213 = vector.broadcast %6 : vector<1x32xf32> to vector<2x32xf32>
    %214 = arith.addf %212, %213 : vector<2x32xf32>
    %215 = arith.mulf %198, %214 : vector<2x32xf32>
    %216 = arith.addf %211, %215 : vector<2x32xf32>
    %217 = math.tanh %216 : vector<2x32xf32>
    %cst_80 = arith.constant 1.000000e+00 : f32
    %218 = vector.broadcast %cst_80 : f32 to vector<2x32xf32>
    %219 = arith.subf %218, %208 : vector<2x32xf32>
    %220 = arith.mulf %219, %217 : vector<2x32xf32>
    %221 = arith.mulf %208, %186 : vector<2x32xf32>
    %222 = arith.addf %220, %221 : vector<2x32xf32>
    %223 = math.tanh %222 : vector<2x32xf32>
    %224 = arith.maximumf %188, %223 : vector<2x32xf32>
    %c6_i32 = arith.constant 6 : i32
    %225 = arith.index_cast %c6_i32 : i32 to index
    %c0_81 = arith.constant 0 : index
    %c0_82 = arith.constant 0 : index
    %226 = vector.load %arg1[%225, %c0_81, %c0_82] : memref<8x2x32xf32, #tpu.memory_space<vmem>>, vector<1x2x32xf32>
    %227 = vector.shape_cast %226 : vector<1x2x32xf32> to vector<2x32xf32>
    %cst_83 = arith.constant dense<0.000000e+00> : vector<2x32xf32>
    %228 = tpu.matmul %222, %1, %cst_83 {dimension_numbers = #tpu.dot_dimension_numbers<[1], [0], [0], [1], [0, 0, 1, 1], [], []>} : vector<2x32xf32>, vector<32x32xf32>, vector<2x32xf32> -> vector<2x32xf32>
    %229 = arith.addf %227, %228 : vector<2x32xf32>
    %230 = arith.negf %229 : vector<2x32xf32>
    %231 = math.exp %230 : vector<2x32xf32>
    %cst_84 = arith.constant 1.000000e+00 : f32
    %232 = vector.broadcast %cst_84 : f32 to vector<2x32xf32>
    %233 = arith.addf %232, %231 : vector<2x32xf32>
    %234 = arith.divf %232, %233 : vector<2x32xf32>
    %235 = arith.index_cast %c6_i32 : i32 to index
    %c0_85 = arith.constant 0 : index
    %c0_86 = arith.constant 0 : index
    %236 = vector.load %arg2[%235, %c0_85, %c0_86] : memref<8x2x32xf32, #tpu.memory_space<vmem>>, vector<1x2x32xf32>
    %237 = vector.shape_cast %236 : vector<1x2x32xf32> to vector<2x32xf32>
    %cst_87 = arith.constant dense<0.000000e+00> : vector<2x32xf32>
    %238 = tpu.matmul %222, %3, %cst_87 {dimension_numbers = #tpu.dot_dimension_numbers<[1], [0], [0], [1], [0, 0, 1, 1], [], []>} : vector<2x32xf32>, vector<32x32xf32>, vector<2x32xf32> -> vector<2x32xf32>
    %239 = arith.addf %237, %238 : vector<2x32xf32>
    %240 = arith.negf %239 : vector<2x32xf32>
    %241 = math.exp %240 : vector<2x32xf32>
    %cst_88 = arith.constant 1.000000e+00 : f32
    %242 = vector.broadcast %cst_88 : f32 to vector<2x32xf32>
    %243 = arith.addf %242, %241 : vector<2x32xf32>
    %244 = arith.divf %242, %243 : vector<2x32xf32>
    %245 = arith.index_cast %c6_i32 : i32 to index
    %c0_89 = arith.constant 0 : index
    %c0_90 = arith.constant 0 : index
    %246 = vector.load %arg3[%245, %c0_89, %c0_90] : memref<8x2x32xf32, #tpu.memory_space<vmem>>, vector<1x2x32xf32>
    %247 = vector.shape_cast %246 : vector<1x2x32xf32> to vector<2x32xf32>
    %cst_91 = arith.constant dense<0.000000e+00> : vector<2x32xf32>
    %248 = tpu.matmul %222, %5, %cst_91 {dimension_numbers = #tpu.dot_dimension_numbers<[1], [0], [0], [1], [0, 0, 1, 1], [], []>} : vector<2x32xf32>, vector<32x32xf32>, vector<2x32xf32> -> vector<2x32xf32>
    %249 = vector.broadcast %6 : vector<1x32xf32> to vector<2x32xf32>
    %250 = arith.addf %248, %249 : vector<2x32xf32>
    %251 = arith.mulf %234, %250 : vector<2x32xf32>
    %252 = arith.addf %247, %251 : vector<2x32xf32>
    %253 = math.tanh %252 : vector<2x32xf32>
    %cst_92 = arith.constant 1.000000e+00 : f32
    %254 = vector.broadcast %cst_92 : f32 to vector<2x32xf32>
    %255 = arith.subf %254, %244 : vector<2x32xf32>
    %256 = arith.mulf %255, %253 : vector<2x32xf32>
    %257 = arith.mulf %244, %222 : vector<2x32xf32>
    %258 = arith.addf %256, %257 : vector<2x32xf32>
    %259 = math.tanh %258 : vector<2x32xf32>
    %260 = arith.maximumf %224, %259 : vector<2x32xf32>
    %c7_i32 = arith.constant 7 : i32
    %261 = arith.index_cast %c7_i32 : i32 to index
    %c0_93 = arith.constant 0 : index
    %c0_94 = arith.constant 0 : index
    %262 = vector.load %arg1[%261, %c0_93, %c0_94] : memref<8x2x32xf32, #tpu.memory_space<vmem>>, vector<1x2x32xf32>
    %263 = vector.shape_cast %262 : vector<1x2x32xf32> to vector<2x32xf32>
    %cst_95 = arith.constant dense<0.000000e+00> : vector<2x32xf32>
    %264 = tpu.matmul %258, %1, %cst_95 {dimension_numbers = #tpu.dot_dimension_numbers<[1], [0], [0], [1], [0, 0, 1, 1], [], []>} : vector<2x32xf32>, vector<32x32xf32>, vector<2x32xf32> -> vector<2x32xf32>
    %265 = arith.addf %263, %264 : vector<2x32xf32>
    %266 = arith.negf %265 : vector<2x32xf32>
    %267 = math.exp %266 : vector<2x32xf32>
    %cst_96 = arith.constant 1.000000e+00 : f32
    %268 = vector.broadcast %cst_96 : f32 to vector<2x32xf32>
    %269 = arith.addf %268, %267 : vector<2x32xf32>
    %270 = arith.divf %268, %269 : vector<2x32xf32>
    %271 = arith.index_cast %c7_i32 : i32 to index
    %c0_97 = arith.constant 0 : index
    %c0_98 = arith.constant 0 : index
    %272 = vector.load %arg2[%271, %c0_97, %c0_98] : memref<8x2x32xf32, #tpu.memory_space<vmem>>, vector<1x2x32xf32>
    %273 = vector.shape_cast %272 : vector<1x2x32xf32> to vector<2x32xf32>
    %cst_99 = arith.constant dense<0.000000e+00> : vector<2x32xf32>
    %274 = tpu.matmul %258, %3, %cst_99 {dimension_numbers = #tpu.dot_dimension_numbers<[1], [0], [0], [1], [0, 0, 1, 1], [], []>} : vector<2x32xf32>, vector<32x32xf32>, vector<2x32xf32> -> vector<2x32xf32>
    %275 = arith.addf %273, %274 : vector<2x32xf32>
    %276 = arith.negf %275 : vector<2x32xf32>
    %277 = math.exp %276 : vector<2x32xf32>
    %cst_100 = arith.constant 1.000000e+00 : f32
    %278 = vector.broadcast %cst_100 : f32 to vector<2x32xf32>
    %279 = arith.addf %278, %277 : vector<2x32xf32>
    %280 = arith.divf %278, %279 : vector<2x32xf32>
    %281 = arith.index_cast %c7_i32 : i32 to index
    %c0_101 = arith.constant 0 : index
    %c0_102 = arith.constant 0 : index
    %282 = vector.load %arg3[%281, %c0_101, %c0_102] : memref<8x2x32xf32, #tpu.memory_space<vmem>>, vector<1x2x32xf32>
    %283 = vector.shape_cast %282 : vector<1x2x32xf32> to vector<2x32xf32>
    %cst_103 = arith.constant dense<0.000000e+00> : vector<2x32xf32>
    %284 = tpu.matmul %258, %5, %cst_103 {dimension_numbers = #tpu.dot_dimension_numbers<[1], [0], [0], [1], [0, 0, 1, 1], [], []>} : vector<2x32xf32>, vector<32x32xf32>, vector<2x32xf32> -> vector<2x32xf32>
    %285 = vector.broadcast %6 : vector<1x32xf32> to vector<2x32xf32>
    %286 = arith.addf %284, %285 : vector<2x32xf32>
    %287 = arith.mulf %270, %286 : vector<2x32xf32>
    %288 = arith.addf %283, %287 : vector<2x32xf32>
    %289 = math.tanh %288 : vector<2x32xf32>
    %cst_104 = arith.constant 1.000000e+00 : f32
    %290 = vector.broadcast %cst_104 : f32 to vector<2x32xf32>
    %291 = arith.subf %290, %280 : vector<2x32xf32>
    %292 = arith.mulf %291, %289 : vector<2x32xf32>
    %293 = arith.mulf %280, %258 : vector<2x32xf32>
    %294 = arith.addf %292, %293 : vector<2x32xf32>
    %295 = math.tanh %294 : vector<2x32xf32>
    %296 = arith.maximumf %260, %295 : vector<2x32xf32>
    %c8_i32 = arith.constant 8 : i32
    %c0_105 = arith.constant 0 : index
    %c0_106 = arith.constant 0 : index
    %297 = vector.load %arg6[%c0_105, %c0_106] : memref<2x32xf32, #tpu.memory_space<vmem>>, vector<2x32xf32>
    tpu.vector_store %arg6[%c0_105, %c0_106], %296 {strides = array<i32>} : memref<2x32xf32, #tpu.memory_space<vmem>>, vector<2x32xf32>,
    return
  }
  func.func @transform_0(%arg0: i32) -> (i32, i32, i32) {
    %c0_i32 = arith.constant 0 : i32
    %c0_i32_0 = arith.constant 0 : i32
    %c0_i32_1 = arith.constant 0 : i32
    %c0_i32_2 = arith.constant 0 : i32
    return %c0_i32, %c0_i32_0, %c0_i32_1 : i32, i32, i32
  }
  func.func @transform_1(%arg0: i32) -> (i32, i32, i32) {
    %c0_i32 = arith.constant 0 : i32
    %c0_i32_0 = arith.constant 0 : i32
    %c0_i32_1 = arith.constant 0 : i32
    %c0_i32_2 = arith.constant 0 : i32
    return %c0_i32, %c0_i32_0, %c0_i32_1 : i32, i32, i32
  }
  func.func @transform_2(%arg0: i32) -> (i32, i32, i32) {
    %c0_i32 = arith.constant 0 : i32
    %c0_i32_0 = arith.constant 0 : i32
    %c0_i32_1 = arith.constant 0 : i32
    %c0_i32_2 = arith.constant 0 : i32
    return %c0_i32, %c0_i32_0, %c0_i32_1 : i32, i32, i32
  }
  func.func @transform_3(%arg0: i32) -> (i32, i32, i32) {
    %c0_i32 = arith.constant 0 : i32
    %c0_i32_0 = arith.constant 0 : i32
    %c0_i32_1 = arith.constant 0 : i32
    %c0_i32_2 = arith.constant 0 : i32
    return %c0_i32, %c0_i32_0, %c0_i32_1 : i32, i32, i32
  }
  func.func @transform_4(%arg0: i32) -> (i32, i32) {
    %c0_i32 = arith.constant 0 : i32
    %c0_i32_0 = arith.constant 0 : i32
    %c0_i32_1 = arith.constant 0 : i32
    return %c0_i32, %c0_i32_0 : i32, i32
  }
  func.func @transform_5(%arg0: i32) -> (i32, i32) {
    %c0_i32 = arith.constant 0 : i32
    %c0_i32_0 = arith.constant 0 : i32
    %c0_i32_1 = arith.constant 0 : i32
    return %c0_i32, %c0_i32_0 : i32, i32
  }
}

</mosaic_0001>

<llo_original>
// kernel: model_forward.1
$region0: #{model_forward.1}
  #allocation0 [shape = 'u32[]', space=smem, size = 0x4, offset = 0x4, fixed_abs, tag = 'smem constant byte address 0x4 - core index']
  #allocation1 [shape = 'u32[144,128]{1,0:T(1,128)}', space=vmem, size = 0x12000, scoped, tag = 'internal scratch']
  %s0 = inlined_call_operand.vmem [shape: f32[8,2,32], index: 0, kind: input, shape index: {}]
  %s1 = inlined_call_operand.vmem [shape: f32[8,2,32], index: 1, kind: input, shape index: {}]
  %s2 = inlined_call_operand.vmem [shape: f32[8,2,32], index: 2, kind: input, shape index: {}]
  %s3 = inlined_call_operand.vmem [shape: f32[3,32,32], index: 3, kind: input, shape index: {}]
  %s4 = inlined_call_operand.vmem [shape: f32[1,32], index: 4, kind: input, shape index: {}]
  %s5 = inlined_call_operand.vmem [shape: f32[2,32], index: 5, kind: output, shape index: {}]
  %s6 = sld [smem:[#allocation0]]
  $region30: #{model_forward.1} parent=0
    _
  %s8 = ssub.s32 1, %s6
  %s9 = scalar_select 0, %s8, %s6
  // Predicated region
  $region2: #{model_forward.1} parent=0 // pred_check
    _
  $region3: #{model_forward.1} parent=0 // pred_check_branch
    %11 = sbr.rel (0) target = $region5
  $region4: #{model_forward.1} parent=0 // pred_region
    _
  $region5: #{model_forward.1} parent=0 // pred_fallthru
    _
  // Predicated region
  $region6: #{model_forward.1} parent=0 // pred_check
    _
  $region7: #{model_forward.1} parent=0 // pred_check_branch
    %13 = sbr.rel (0) target = $region9
  $region8: #{model_forward.1} parent=0 // pred_region
    _
  $region9: #{model_forward.1} parent=0 // pred_fallthru
    _
  // Predicated region
  $region10: #{model_forward.1} parent=0 // pred_check
    _
  $region11: #{model_forward.1} parent=0 // pred_check_branch
    %15 = sbr.rel (0) target = $region13
  $region12: #{model_forward.1} parent=0 // pred_region
    _
  $region13: #{model_forward.1} parent=0 // pred_fallthru
    _
  // Predicated region
  $region14: #{model_forward.1} parent=0 // pred_check
    _
  $region15: #{model_forward.1} parent=0 // pred_check_branch
    %17 = sbr.rel (0) target = $region17
  $region16: #{model_forward.1} parent=0 // pred_region
    _
  $region17: #{model_forward.1} parent=0 // pred_fallthru
    _
  // Predicated region
  $region18: #{model_forward.1} parent=0 // pred_check
    _
  $region19: #{model_forward.1} parent=0 // pred_check_branch
    %19 = sbr.rel (0) target = $region21
  $region20: #{model_forward.1} parent=0 // pred_region
    _
  $region21: #{model_forward.1} parent=0 // pred_fallthru
    _
  %v20 = vld [vmem:[%s3] sm:$0xff]
  %v21 = vld [vmem:[%s3 + $0x8] sm:$0xff]
  %v22 = vld [vmem:[%s3 + $0x10] sm:$0xff]
  %v23 = vld [vmem:[%s3 + $0x18] sm:$0xff]
  %s24 = scalar_lea.vmem %s3, 32
  %v25 = vld [vmem:[%s24] sm:$0xff]
  %v26 = vld [vmem:[%s24 + $0x8] sm:$0xff]
  %v27 = vld [vmem:[%s24 + $0x10] sm:$0xff]
  %v28 = vld [vmem:[%s24 + $0x18] sm:$0xff]
  %s29 = scalar_lea.vmem %s3, 64
  %v30 = vld [vmem:[%s29] sm:$0xff]
  %v31 = vld [vmem:[%s29 + $0x8] sm:$0xff]
  %v32 = vld [vmem:[%s29 + $0x10] sm:$0xff]
  %v33 = vld [vmem:[%s29 + $0x18] sm:$0xff]
  %v34 = vld [vmem:[%s4] sm:$0x1]
  %v35 = vld [vmem:[%s0] sm:$0x3]
  %vm36 = vcmask 261120
  %v38 = vsel %vm36, 0.0, 0
  %40 = vmatprep.subr.mxu0 0.0
  %41 = vmatpush1.msra.mxu0 %v20
  %42 = vmatprep.subr.mxu0 0.0
  %43 = vmatpush1.msra.mxu0 %v21
  %44 = vmatprep.subr.mxu0 0.0
  %45 = vmatpush1.msra.mxu0 %v22
  %46 = vmatprep.subr.mxu0 0.0
  %47 = vmatpush1.msra.mxu0 %v23
  %48 = vmatprep.subr.mxu0 0.0
  %49 = vmatpush1.msra.mxu0 0.0
  %50 = vmatprep.subr.mxu0 0.0
  %51 = vmatpush1.msra.mxu0 0.0
  %52 = vmatprep.subr.mxu0 0.0
  %53 = vmatpush1.msra.mxu0 0.0
  %54 = vmatprep.subr.mxu0 0.0
  %55 = vmatpush1.msra.mxu0 0.0
  %56 = vmatprep.subr.mxu0 0.0
  %57 = vmatpush1.msra.mxu0 0.0
  %58 = vmatprep.subr.mxu0 0.0
  %59 = vmatpush1.msra.mxu0 0.0
  %60 = vmatprep.subr.mxu0 0.0
  %61 = vmatpush1.msra.mxu0 0.0
  %62 = vmatprep.subr.mxu0 0.0
  %63 = vmatpush1.msra.mxu0 0.0
  %64 = vmatprep.subr.mxu0 0.0
  %65 = vmatpush1.msra.mxu0 0.0
  %66 = vmatprep.subr.mxu0 0.0
  %67 = vmatpush1.msra.mxu0 0.0
  %68 = vmatprep.subr.mxu0 0.0
  %69 = vmatpush1.msra.mxu0 0.0
  %70 = vmatprep.subr.mxu0 0.0
  %71 = vmatpush1.msra.mxu0 0.0
  %72 = vmatprep.subr.mxu0 0.0
  %73 = vmatpush1.msra.mxu0 0.0
  %74 = vmatprep.subr.mxu0 0.0
  %75 = vmatpush1.msra.mxu0 0.0
  %76 = vmatprep.subr.mxu0 0.0
  %77 = vmatpush1.msra.mxu0 0.0
  %78 = vmatprep.subr.mxu0 0.0
  %79 = vmatpush1.msra.mxu0 0.0
  %80 = vmatprep.subr.mxu0 0.0
  %81 = vmatpush1.msra.mxu0 0.0
  %82 = vmatprep.subr.mxu0 0.0
  %83 = vmatpush1.msra.mxu0 0.0
  %84 = vmatprep.subr.mxu0 0.0
  %85 = vmatpush1.msra.mxu0 0.0
  %86 = vmatprep.subr.mxu0 0.0
  %87 = vmatpush1.msra.mxu0 0.0
  %88 = vmatprep.subr.mxu0 0.0
  %89 = vmatpush1.msra.mxu0 0.0
  %90 = vmatprep.subr.mxu0 0.0
  %91 = vmatpush1.msra.mxu0 0.0
  %92 = vmatprep.subr.mxu0 0.0
  %93 = vmatpush1.msra.mxu0 0.0
  %94 = vmatprep.subr.mxu0 0.0
  %95 = vmatpush1.msra.mxu0 0.0
  %96 = vmatprep.subr.mxu0 0.0
  %97 = vmatpush1.msra.mxu0 0.0
  %98 = vmatprep.subr.mxu0 0.0
  %99 = vmatpush1.msra.mxu0 0.0
  %100 = vmatprep.subr.mxu0 0.0
  %101 = vmatpush1.msra.mxu0 0.0
  %102 = vmatprep.subr.mxu0 0.0
  %103 = vmatpush1.msra.mxu0 0.0
  %104 = vmatprep.mubr.f32.mxu0 0.0
  %105 = vmatmul.mubr.f32.gmra.mrb[0].mxu0 %v38
  %v106 = vpop.f32.mrb[0].mxu0
  %v107 = vadd.f32 0.0, %v106
  %v108 = vpop.f32.mrb[0].mxu0
  %109 = vdwg.mxu0
  %v110 = vadd.f32 %v35, %v107
  %v111 = vxor.u32 %v110, 2147483648
  %v112 = vmul.f32 %v111, 1.442695
  %v113 = vpow.pop %v112
  %v114 = vadd.f32 %v113, 1.0
  %v115 = vrcp.pop %v114
  %v116 = vmul.f32 1.0, %v115
  %v117 = vld [vmem:[%s1] sm:$0x3]
  %118 = vmatprep.subr.mxu0 0.0
  %119 = vmatpush1.msra.mxu0 %v25
  %120 = vmatprep.subr.mxu0 0.0
  %121 = vmatpush1.msra.mxu0 %v26
  %122 = vmatprep.subr.mxu0 0.0
  %123 = vmatpush1.msra.mxu0 %v27
  %124 = vmatprep.subr.mxu0 0.0
  %125 = vmatpush1.msra.mxu0 %v28
  %126 = vmatprep.subr.mxu0 0.0
  %127 = vmatpush1.msra.mxu0 0.0
  %128 = vmatprep.subr.mxu0 0.0
  %129 = vmatpush1.msra.mxu0 0.0
  %130 = vmatprep.subr.mxu0 0.0
  %131 = vmatpush1.msra.mxu0 0.0
  %132 = vmatprep.subr.mxu0 0.0
  %133 = vmatpush1.msra.mxu0 0.0
  %134 = vmatprep.subr.mxu0 0.0
  %135 = vmatpush1.msra.mxu0 0.0
  %136 = vmatprep.subr.mxu0 0.0
  %137 = vmatpush1.msra.mxu0 0.0
  %138 = vmatprep.subr.mxu0 0.0
  %139 = vmatpush1.msra.mxu0 0.0
  %140 = vmatprep.subr.mxu0 0.0
  %141 = vmatpush1.msra.mxu0 0.0
  %142 = vmatprep.subr.mxu0 0.0
  %143 = vmatpush1.msra.mxu0 0.0
  %144 = vmatprep.subr.mxu0 0.0
  %145 = vmatpush1.msra.mxu0 0.0
  %146 = vmatprep.subr.mxu0 0.0
  %147 = vmatpush1.msra.mxu0 0.0
  %148 = vmatprep.subr.mxu0 0.0
  %149 = vmatpush1.msra.mxu0 0.0
  %150 = vmatprep.subr.mxu0 0.0
  %151 = vmatpush1.msra.mxu0 0.0
  %152 = vmatprep.subr.mxu0 0.0
  %153 = vmatpush1.msra.mxu0 0.0
  %154 = vmatprep.subr.mxu0 0.0
  %155 = vmatpush1.msra.mxu0 0.0
  %156 = vmatprep.subr.mxu0 0.0
  %157 = vmatpush1.msra.mxu0 0.0
  %158 = vmatprep.subr.mxu0 0.0
  %159 = vmatpush1.msra.mxu0 0.0
  %160 = vmatprep.subr.mxu0 0.0
  %161 = vmatpush1.msra.mxu0 0.0
  %162 = vmatprep.subr.mxu0 0.0
  %163 = vmatpush1.msra.mxu0 0.0
  %164 = vmatprep.subr.mxu0 0.0
  %165 = vmatpush1.msra.mxu0 0.0
  %166 = vmatprep.subr.mxu0 0.0
  %167 = vmatpush1.msra.mxu0 0.0
  %168 = vmatprep.subr.mxu0 0.0
  %169 = vmatpush1.msra.mxu0 0.0
  %170 = vmatprep.subr.mxu0 0.0
  %171 = vmatpush1.msra.mxu0 0.0
  %172 = vmatprep.subr.mxu0 0.0
  %173 = vmatpush1.msra.mxu0 0.0
  %174 = vmatprep.subr.mxu0 0.0
  %175 = vmatpush1.msra.mxu0 0.0
  %176 = vmatprep.subr.mxu0 0.0
  %177 = vmatpush1.msra.mxu0 0.0
  %178 = vmatprep.subr.mxu0 0.0
  %179 = vmatpush1.msra.mxu0 0.0
  %180 = vmatprep.subr.mxu0 0.0
  %181 = vmatpush1.msra.mxu0 0.0
  %182 = vmatprep.mubr.f32.mxu0 0.0
  %183 = vmatmul.mubr.f32.gmra.mrb[0].mxu0 %v38
  %v184 = vpop.f32.mrb[0].mxu0
  %v185 = vadd.f32 0.0, %v184
  %v186 = vpop.f32.mrb[0].mxu0
  %187 = vdwg.mxu0
  %v188 = vadd.f32 %v117, %v185
  %v189 = vxor.u32 %v188, 2147483648
  %v190 = vmul.f32 %v189, 1.442695
  %v191 = vpow.pop %v190
  %v192 = vadd.f32 %v191, 1.0
  %v193 = vrcp.pop %v192
  %v194 = vmul.f32 1.0, %v193
  %v195 = vld [vmem:[%s2] sm:$0x3]
  %v197 = vlaneseq
  %v198 = vshrl.u32 %v197, 7
  %v199 = vsub.s32 0, %v198
  %v200 = vrot.slane %v34, %v199
  %202 = vmatprep.subr.mxu0 0.0
  %203 = vmatpush1.msra.mxu0 %v30
  %204 = vmatprep.subr.mxu0 0.0
  %205 = vmatpush1.msra.mxu0 %v31
  %206 = vmatprep.subr.mxu0 0.0
  %207 = vmatpush1.msra.mxu0 %v32
  %208 = vmatprep.subr.mxu0 0.0
  %209 = vmatpush1.msra.mxu0 %v33
  %210 = vmatprep.subr.mxu0 0.0
  %211 = vmatpush1.msra.mxu0 0.0
  %212 = vmatprep.subr.mxu0 0.0
  %213 = vmatpush1.msra.mxu0 0.0
  %214 = vmatprep.subr.mxu0 0.0
  %215 = vmatpush1.msra.mxu0 0.0
  %216 = vmatprep.subr.mxu0 0.0
  %217 = vmatpush1.msra.mxu0 0.0
  %218 = vmatprep.subr.mxu0 0.0
  %219 = vmatpush1.msra.mxu0 0.0
  %220 = vmatprep.subr.mxu0 0.0
  %221 = vmatpush1.msra.mxu0 0.0
  %222 = vmatprep.subr.mxu0 0.0
  %223 = vmatpush1.msra.mxu0 0.0
  %224 = vmatprep.subr.mxu0 0.0
  %225 = vmatpush1.msra.mxu0 0.0
  %226 = vmatprep.subr.mxu0 0.0
  %227 = vmatpush1.msra.mxu0 0.0
  %228 = vmatprep.subr.mxu0 0.0
  %229 = vmatpush1.msra.mxu0 0.0
  %230 = vmatprep.subr.mxu0 0.0
  %231 = vmatpush1.msra.mxu0 0.0
  %232 = vmatprep.subr.mxu0 0.0
  %233 = vmatpush1.msra.mxu0 0.0
  %234 = vmatprep.subr.mxu0 0.0
  %235 = vmatpush1.msra.mxu0 0.0
  %236 = vmatprep.subr.mxu0 0.0
  %237 = vmatpush1.msra.mxu0 0.0
  %238 = vmatprep.subr.mxu0 0.0
  %239 = vmatpush1.msra.mxu0 0.0
  %240 = vmatprep.subr.mxu0 0.0
  %241 = vmatpush1.msra.mxu0 0.0
  %242 = vmatprep.subr.mxu0 0.0
  %243 = vmatpush1.msra.mxu0 0.0
  %244 = vmatprep.subr.mxu0 0.0
  %245 = vmatpush1.msra.mxu0 0.0
  %246 = vmatprep.subr.mxu0 0.0
  %247 = vmatpush1.msra.mxu0 0.0
  %248 = vmatprep.subr.mxu0 0.0
  %249 = vmatpush1.msra.mxu0 0.0
  %250 = vmatprep.subr.mxu0 0.0
  %251 = vmatpush1.msra.mxu0 0.0
  %252 = vmatprep.subr.mxu0 0.0
  %253 = vmatpush1.msra.mxu0 0.0
  %254 = vmatprep.subr.mxu0 0.0
  %255 = vmatpush1.msra.mxu0 0.0
  %256 = vmatprep.subr.mxu0 0.0
  %257 = vmatpush1.msra.mxu0 0.0
  %258 = vmatprep.subr.mxu0 0.0
  %259 = vmatpush1.msra.mxu0 0.0
  %260 = vmatprep.subr.mxu0 0.0
  %261 = vmatpush1.msra.mxu0 0.0
  %262 = vmatprep.subr.mxu0 0.0
  %263 = vmatpush1.msra.mxu0 0.0
  %264 = vmatprep.subr.mxu0 0.0
  %265 = vmatpush1.msra.mxu0 0.0
  %266 = vmatprep.mubr.f32.mxu0 0.0
  %267 = vmatmul.mubr.f32.gmra.mrb[0].mxu0 %v38
  %v268 = vpop.f32.mrb[0].mxu0
  %v269 = vadd.f32 %v200, %v268
  %v270 = vpop.f32.mrb[0].mxu0
  %271 = vdwg.mxu0
  %v272 = vmul.f32 %v116, %v269
  %v273 = vadd.f32 %v195, %v272
  %v274 = vtanh.pop %v273
  %v275 = vsub.f32 1.0, %v194
  %v276 = vmul.f32 %v275, %v274
  %v277 = vmul.f32 %v194, 0.0
  %v278 = vadd.f32 %v276, %v277
  %v279 = vtanh.pop %v278
  %s280 = scalar_lea.vmem %s0, 2
  %v281 = vld [vmem:[%s280] sm:$0x3]
  %v283 = vsel %vm36, %v278, 0
  %285 = vmatprep.subr.mxu0 0.0
  %286 = vmatpush1.msra.mxu0 %v20
  %287 = vmatprep.subr.mxu0 0.0
  %288 = vmatpush1.msra.mxu0 %v21
  %289 = vmatprep.subr.mxu0 0.0
  %290 = vmatpush1.msra.mxu0 %v22
  %291 = vmatprep.subr.mxu0 0.0
  %292 = vmatpush1.msra.mxu0 %v23
  %293 = vmatprep.subr.mxu0 0.0
  %294 = vmatpush1.msra.mxu0 0.0
  %295 = vmatprep.subr.mxu0 0.0
  %296 = vmatpush1.msra.mxu0 0.0
  %297 = vmatprep.subr.mxu0 0.0
  %298 = vmatpush1.msra.mxu0 0.0
  %299 = vmatprep.subr.mxu0 0.0
  %300 = vmatpush1.msra.mxu0 0.0
  %301 = vmatprep.subr.mxu0 0.0
  %302 = vmatpush1.msra.mxu0 0.0
  %303 = vmatprep.subr.mxu0 0.0
  %304 = vmatpush1.msra.mxu0 0.0
  %305 = vmatprep.subr.mxu0 0.0
  %306 = vmatpush1.msra.mxu0 0.0
  %307 = vmatprep.subr.mxu0 0.0
  %308 = vmatpush1.msra.mxu0 0.0
  %309 = vmatprep.subr.mxu0 0.0
  %310 = vmatpush1.msra.mxu0 0.0
  %311 = vmatprep.subr.mxu0 0.0
  %312 = vmatpush1.msra.mxu0 0.0
  %313 = vmatprep.subr.mxu0 0.0
  %314 = vmatpush1.msra.mxu0 0.0
  %315 = vmatprep.subr.mxu0 0.0
  %316 = vmatpush1.msra.mxu0 0.0
  %317 = vmatprep.subr.mxu0 0.0
  %318 = vmatpush1.msra.mxu0 0.0
  %319 = vmatprep.subr.mxu0 0.0
  %320 = vmatpush1.msra.mxu0 0.0
  %321 = vmatprep.subr.mxu0 0.0
  %322 = vmatpush1.msra.mxu0 0.0
  %323 = vmatprep.subr.mxu0 0.0
  %324 = vmatpush1.msra.mxu0 0.0
  %325 = vmatprep.subr.mxu0 0.0
  %326 = vmatpush1.msra.mxu0 0.0
  %327 = vmatprep.subr.mxu0 0.0
  %328 = vmatpush1.msra.mxu0 0.0
  %329 = vmatprep.subr.mxu0 0.0
  %330 = vmatpush1.msra.mxu0 0.0
  %331 = vmatprep.subr.mxu0 0.0
  %332 = vmatpush1.msra.mxu0 0.0
  %333 = vmatprep.subr.mxu0 0.0
  %334 = vmatpush1.msra.mxu0 0.0
  %335 = vmatprep.subr.mxu0 0.0
  %336 = vmatpush1.msra.mxu0 0.0
  %337 = vmatprep.subr.mxu0 0.0
  %338 = vmatpush1.msra.mxu0 0.0
  %339 = vmatprep.subr.mxu0 0.0
  %340 = vmatpush1.msra.mxu0 0.0
  %341 = vmatprep.subr.mxu0 0.0
  %342 = vmatpush1.msra.mxu0 0.0
  %343 = vmatprep.subr.mxu0 0.0
  %344 = vmatpush1.msra.mxu0 0.0
  %345 = vmatprep.subr.mxu0 0.0
  %346 = vmatpush1.msra.mxu0 0.0
  %347 = vmatprep.subr.mxu0 0.0
  %348 = vmatpush1.msra.mxu0 0.0
  %349 = vmatprep.mubr.f32.mxu0 0.0
  %350 = vmatmul.mubr.f32.gmra.mrb[0].mxu0 %v283
  %v351 = vpop.f32.mrb[0].mxu0
  %v352 = vadd.f32 0.0, %v351
  %v353 = vpop.f32.mrb[0].mxu0
  %354 = vdwg.mxu0
  %v355 = vadd.f32 %v281, %v352
  %v356 = vxor.u32 %v355, 2147483648
  %v357 = vmul.f32 %v356, 1.442695
  %v358 = vpow.pop %v357
  %v359 = vadd.f32 %v358, 1.0
  %v360 = vrcp.pop %v359
  %v361 = vmul.f32 1.0, %v360
  %s362 = scalar_lea.vmem %s1, 2
  %v363 = vld [vmem:[%s362] sm:$0x3]
  %364 = vmatprep.subr.mxu0 0.0
  %365 = vmatpush1.msra.mxu0 %v25
  %366 = vmatprep.subr.mxu0 0.0
  %367 = vmatpush1.msra.mxu0 %v26
  %368 = vmatprep.subr.mxu0 0.0
  %369 = vmatpush1.msra.mxu0 %v27
  %370 = vmatprep.subr.mxu0 0.0
  %371 = vmatpush1.msra.mxu0 %v28
  %372 = vmatprep.subr.mxu0 0.0
  %373 = vmatpush1.msra.mxu0 0.0
  %374 = vmatprep.subr.mxu0 0.0
  %375 = vmatpush1.msra.mxu0 0.0
  %376 = vmatprep.subr.mxu0 0.0
  %377 = vmatpush1.msra.mxu0 0.0
  %378 = vmatprep.subr.mxu0 0.0
  %379 = vmatpush1.msra.mxu0 0.0
  %380 = vmatprep.subr.mxu0 0.0
  %381 = vmatpush1.msra.mxu0 0.0
  %382 = vmatprep.subr.mxu0 0.0
  %383 = vmatpush1.msra.mxu0 0.0
  %384 = vmatprep.subr.mxu0 0.0
  %385 = vmatpush1.msra.mxu0 0.0
  %386 = vmatprep.subr.mxu0 0.0
  %387 = vmatpush1.msra.mxu0 0.0
  %388 = vmatprep.subr.mxu0 0.0
  %389 = vmatpush1.msra.mxu0 0.0
  %390 = vmatprep.subr.mxu0 0.0
  %391 = vmatpush1.msra.mxu0 0.0
  %392 = vmatprep.subr.mxu0 0.0
  %393 = vmatpush1.msra.mxu0 0.0
  %394 = vmatprep.subr.mxu0 0.0
  %395 = vmatpush1.msra.mxu0 0.0
  %396 = vmatprep.subr.mxu0 0.0
  %397 = vmatpush1.msra.mxu0 0.0
  %398 = vmatprep.subr.mxu0 0.0
  %399 = vmatpush1.msra.mxu0 0.0
  %400 = vmatprep.subr.mxu0 0.0
  %401 = vmatpush1.msra.mxu0 0.0
  %402 = vmatprep.subr.mxu0 0.0
  %403 = vmatpush1.msra.mxu0 0.0
  %404 = vmatprep.subr.mxu0 0.0
  %405 = vmatpush1.msra.mxu0 0.0
  %406 = vmatprep.subr.mxu0 0.0
  %407 = vmatpush1.msra.mxu0 0.0
  %408 = vmatprep.subr.mxu0 0.0
  %409 = vmatpush1.msra.mxu0 0.0
  %410 = vmatprep.subr.mxu0 0.0
  %411 = vmatpush1.msra.mxu0 0.0
  %412 = vmatprep.subr.mxu0 0.0
  %413 = vmatpush1.msra.mxu0 0.0
  %414 = vmatprep.subr.mxu0 0.0
  %415 = vmatpush1.msra.mxu0 0.0
  %416 = vmatprep.subr.mxu0 0.0
  %417 = vmatpush1.msra.mxu0 0.0
  %418 = vmatprep.subr.mxu0 0.0
  %419 = vmatpush1.msra.mxu0 0.0
  %420 = vmatprep.subr.mxu0 0.0
  %421 = vmatpush1.msra.mxu0 0.0
  %422 = vmatprep.subr.mxu0 0.0
  %423 = vmatpush1.msra.mxu0 0.0
  %424 = vmatprep.subr.mxu0 0.0
  %425 = vmatpush1.msra.mxu0 0.0
  %426 = vmatprep.subr.mxu0 0.0
  %427 = vmatpush1.msra.mxu0 0.0
  %428 = vmatprep.mubr.f32.mxu0 0.0
  %429 = vmatmul.mubr.f32.gmra.mrb[0].mxu0 %v283
  %v430 = vpop.f32.mrb[0].mxu0
  %v431 = vadd.f32 0.0, %v430
  %v432 = vpop.f32.mrb[0].mxu0
  %433 = vdwg.mxu0
  %v434 = vadd.f32 %v363, %v431
  %v435 = vxor.u32 %v434, 2147483648
  %v436 = vmul.f32 %v435, 1.442695
  %v437 = vpow.pop %v436
  %v438 = vadd.f32 %v437, 1.0
  %v439 = vrcp.pop %v438
  %v440 = vmul.f32 1.0, %v439
  %s441 = scalar_lea.vmem %s2, 2
  %v442 = vld [vmem:[%s441] sm:$0x3]
  %443 = vmatprep.subr.mxu0 0.0
  %444 = vmatpush1.msra.mxu0 %v30
  %445 = vmatprep.subr.mxu0 0.0
  %446 = vmatpush1.msra.mxu0 %v31
  %447 = vmatprep.subr.mxu0 0.0
  %448 = vmatpush1.msra.mxu0 %v32
  %449 = vmatprep.subr.mxu0 0.0
  %450 = vmatpush1.msra.mxu0 %v33
  %451 = vmatprep.subr.mxu0 0.0
  %452 = vmatpush1.msra.mxu0 0.0
  %453 = vmatprep.subr.mxu0 0.0
  %454 = vmatpush1.msra.mxu0 0.0
  %455 = vmatprep.subr.mxu0 0.0
  %456 = vmatpush1.msra.mxu0 0.0
  %457 = vmatprep.subr.mxu0 0.0
  %458 = vmatpush1.msra.mxu0 0.0
  %459 = vmatprep.subr.mxu0 0.0
  %460 = vmatpush1.msra.mxu0 0.0
  %461 = vmatprep.subr.mxu0 0.0
  %462 = vmatpush1.msra.mxu0 0.0
  %463 = vmatprep.subr.mxu0 0.0
  %464 = vmatpush1.msra.mxu0 0.0
  %465 = vmatprep.subr.mxu0 0.0
  %466 = vmatpush1.msra.mxu0 0.0
  %467 = vmatprep.subr.mxu0 0.0
  %468 = vmatpush1.msra.mxu0 0.0
  %469 = vmatprep.subr.mxu0 0.0
  %470 = vmatpush1.msra.mxu0 0.0
  %471 = vmatprep.subr.mxu0 0.0
  %472 = vmatpush1.msra.mxu0 0.0
  %473 = vmatprep.subr.mxu0 0.0
  %474 = vmatpush1.msra.mxu0 0.0
  %475 = vmatprep.subr.mxu0 0.0
  %476 = vmatpush1.msra.mxu0 0.0
  %477 = vmatprep.subr.mxu0 0.0
  %478 = vmatpush1.msra.mxu0 0.0
  %479 = vmatprep.subr.mxu0 0.0
  %480 = vmatpush1.msra.mxu0 0.0
  %481 = vmatprep.subr.mxu0 0.0
  %482 = vmatpush1.msra.mxu0 0.0
  %483 = vmatprep.subr.mxu0 0.0
  %484 = vmatpush1.msra.mxu0 0.0
  %485 = vmatprep.subr.mxu0 0.0
  %486 = vmatpush1.msra.mxu0 0.0
  %487 = vmatprep.subr.mxu0 0.0
  %488 = vmatpush1.msra.mxu0 0.0
  %489 = vmatprep.subr.mxu0 0.0
  %490 = vmatpush1.msra.mxu0 0.0
  %491 = vmatprep.subr.mxu0 0.0
  %492 = vmatpush1.msra.mxu0 0.0
  %493 = vmatprep.subr.mxu0 0.0
  %494 = vmatpush1.msra.mxu0 0.0
  %495 = vmatprep.subr.mxu0 0.0
  %496 = vmatpush1.msra.mxu0 0.0
  %497 = vmatprep.subr.mxu0 0.0
  %498 = vmatpush1.msra.mxu0 0.0
  %499 = vmatprep.subr.mxu0 0.0
  %500 = vmatpush1.msra.mxu0 0.0
  %501 = vmatprep.subr.mxu0 0.0
  %502 = vmatpush1.msra.mxu0 0.0
  %503 = vmatprep.subr.mxu0 0.0
  %504 = vmatpush1.msra.mxu0 0.0
  %505 = vmatprep.subr.mxu0 0.0
  %506 = vmatpush1.msra.mxu0 0.0
  %507 = vmatprep.mubr.f32.mxu0 0.0
  %508 = vmatmul.mubr.f32.gmra.mrb[0].mxu0 %v283
  %v509 = vpop.f32.mrb[0].mxu0
  %v510 = vadd.f32 %v200, %v509
  %v511 = vpop.f32.mrb[0].mxu0
  %512 = vdwg.mxu0
  %v513 = vmul.f32 %v361, %v510
  %v514 = vadd.f32 %v442, %v513
  %v515 = vtanh.pop %v514
  %v516 = vsub.f32 1.0, %v440
  %v517 = vmul.f32 %v516, %v515
  %v518 = vmul.f32 %v440, %v278
  %v519 = vadd.f32 %v517, %v518
  %v520 = vtanh.pop %v519
  %v521 = vmax.f32 %v279, %v520
  %s522 = scalar_lea.vmem %s0, 4
  %v523 = vld [vmem:[%s522] sm:$0x3]
  %v525 = vsel %vm36, %v519, 0
  %527 = vmatprep.subr.mxu0 0.0
  %528 = vmatpush1.msra.mxu0 %v20
  %529 = vmatprep.subr.mxu0 0.0
  %530 = vmatpush1.msra.mxu0 %v21
  %531 = vmatprep.subr.mxu0 0.0
  %532 = vmatpush1.msra.mxu0 %v22
  %533 = vmatprep.subr.mxu0 0.0
  %534 = vmatpush1.msra.mxu0 %v23
  %535 = vmatprep.subr.mxu0 0.0
  %536 = vmatpush1.msra.mxu0 0.0
  %537 = vmatprep.subr.mxu0 0.0
  %538 = vmatpush1.msra.mxu0 0.0
  %539 = vmatprep.subr.mxu0 0.0
  %540 = vmatpush1.msra.mxu0 0.0
  %541 = vmatprep.subr.mxu0 0.0
  %542 = vmatpush1.msra.mxu0 0.0
  %543 = vmatprep.subr.mxu0 0.0
  %544 = vmatpush1.msra.mxu0 0.0
  %545 = vmatprep.subr.mxu0 0.0
  %546 = vmatpush1.msra.mxu0 0.0
  %547 = vmatprep.subr.mxu0 0.0
  %548 = vmatpush1.msra.mxu0 0.0
  %549 = vmatprep.subr.mxu0 0.0
  %550 = vmatpush1.msra.mxu0 0.0
  %551 = vmatprep.subr.mxu0 0.0
  %552 = vmatpush1.msra.mxu0 0.0
  %553 = vmatprep.subr.mxu0 0.0
  %554 = vmatpush1.msra.mxu0 0.0
  %555 = vmatprep.subr.mxu0 0.0
  %556 = vmatpush1.msra.mxu0 0.0
  %557 = vmatprep.subr.mxu0 0.0
  %558 = vmatpush1.msra.mxu0 0.0
  %559 = vmatprep.subr.mxu0 0.0
  %560 = vmatpush1.msra.mxu0 0.0
  %561 = vmatprep.subr.mxu0 0.0
  %562 = vmatpush1.msra.mxu0 0.0
  %563 = vmatprep.subr.mxu0 0.0
  %564 = vmatpush1.msra.mxu0 0.0
  %565 = vmatprep.subr.mxu0 0.0
  %566 = vmatpush1.msra.mxu0 0.0
  %567 = vmatprep.subr.mxu0 0.0
  %568 = vmatpush1.msra.mxu0 0.0
  %569 = vmatprep.subr.mxu0 0.0
  %570 = vmatpush1.msra.mxu0 0.0
  %571 = vmatprep.subr.mxu0 0.0
  %572 = vmatpush1.msra.mxu0 0.0
  %573 = vmatprep.subr.mxu0 0.0
  %574 = vmatpush1.msra.mxu0 0.0
  %575 = vmatprep.subr.mxu0 0.0
  %576 = vmatpush1.msra.mxu0 0.0
  %577 = vmatprep.subr.mxu0 0.0
  %578 = vmatpush1.msra.mxu0 0.0
  %579 = vmatprep.subr.mxu0 0.0
  %580 = vmatpush1.msra.mxu0 0.0
  %581 = vmatprep.subr.mxu0 0.0
  %582 = vmatpush1.msra.mxu0 0.0
  %583 = vmatprep.subr.mxu0 0.0
  %584 = vmatpush1.msra.mxu0 0.0
  %585 = vmatprep.subr.mxu0 0.0
  %586 = vmatpush1.msra.mxu0 0.0
  %587 = vmatprep.subr.mxu0 0.0
  %588 = vmatpush1.msra.mxu0 0.0
  %589 = vmatprep.subr.mxu0 0.0
  %590 = vmatpush1.msra.mxu0 0.0
  %591 = vmatprep.mubr.f32.mxu0 0.0
  %592 = vmatmul.mubr.f32.gmra.mrb[0].mxu0 %v525
  %v593 = vpop.f32.mrb[0].mxu0
  %v594 = vadd.f32 0.0, %v593
  %v595 = vpop.f32.mrb[0].mxu0
  %596 = vdwg.mxu0
  %v597 = vadd.f32 %v523, %v594
  %v598 = vxor.u32 %v597, 2147483648
  %v599 = vmul.f32 %v598, 1.442695
  %v600 = vpow.pop %v599
  %v601 = vadd.f32 %v600, 1.0
  %v602 = vrcp.pop %v601
  %v603 = vmul.f32 1.0, %v602
  %s604 = scalar_lea.vmem %s1, 4
  %v605 = vld [vmem:[%s604] sm:$0x3]
  %606 = vmatprep.subr.mxu0 0.0
  %607 = vmatpush1.msra.mxu0 %v25
  %608 = vmatprep.subr.mxu0 0.0
  %609 = vmatpush1.msra.mxu0 %v26
  %610 = vmatprep.subr.mxu0 0.0
  %611 = vmatpush1.msra.mxu0 %v27
  %612 = vmatprep.subr.mxu0 0.0
  %613 = vmatpush1.msra.mxu0 %v28
  %614 = vmatprep.subr.mxu0 0.0
  %615 = vmatpush1.msra.mxu0 0.0
  %616 = vmatprep.subr.mxu0 0.0
  %617 = vmatpush1.msra.mxu0 0.0
  %618 = vmatprep.subr.mxu0 0.0
  %619 = vmatpush1.msra.mxu0 0.0
  %620 = vmatprep.subr.mxu0 0.0
  %621 = vmatpush1.msra.mxu0 0.0
  %622 = vmatprep.subr.mxu0 0.0
  %623 = vmatpush1.msra.mxu0 0.0
  %624 = vmatprep.subr.mxu0 0.0
  %625 = vmatpush1.msra.mxu0 0.0
  %626 = vmatprep.subr.mxu0 0.0
  %627 = vmatpush1.msra.mxu0 0.0
  %628 = vmatprep.subr.mxu0 0.0
  %629 = vmatpush1.msra.mxu0 0.0
  %630 = vmatprep.subr.mxu0 0.0
  %631 = vmatpush1.msra.mxu0 0.0
  %632 = vmatprep.subr.mxu0 0.0
  %633 = vmatpush1.msra.mxu0 0.0
  %634 = vmatprep.subr.mxu0 0.0
  %635 = vmatpush1.msra.mxu0 0.0
  %636 = vmatprep.subr.mxu0 0.0
  %637 = vmatpush1.msra.mxu0 0.0
  %638 = vmatprep.subr.mxu0 0.0
  %639 = vmatpush1.msra.mxu0 0.0
  %640 = vmatprep.subr.mxu0 0.0
  %641 = vmatpush1.msra.mxu0 0.0
  %642 = vmatprep.subr.mxu0 0.0
  %643 = vmatpush1.msra.mxu0 0.0
  %644 = vmatprep.subr.mxu0 0.0
  %645 = vmatpush1.msra.mxu0 0.0
  %646 = vmatprep.subr.mxu0 0.0
  %647 = vmatpush1.msra.mxu0 0.0
  %648 = vmatprep.subr.mxu0 0.0
  %649 = vmatpush1.msra.mxu0 0.0
  %650 = vmatprep.subr.mxu0 0.0
  %651 = vmatpush1.msra.mxu0 0.0
  %652 = vmatprep.subr.mxu0 0.0
  %653 = vmatpush1.msra.mxu0 0.0
  %654 = vmatprep.subr.mxu0 0.0
  %655 = vmatpush1.msra.mxu0 0.0
  %656 = vmatprep.subr.mxu0 0.0
  %657 = vmatpush1.msra.mxu0 0.0
  %658 = vmatprep.subr.mxu0 0.0
  %659 = vmatpush1.msra.mxu0 0.0
  %660 = vmatprep.subr.mxu0 0.0
  %661 = vmatpush1.msra.mxu0 0.0
  %662 = vmatprep.subr.mxu0 0.0
  %663 = vmatpush1.msra.mxu0 0.0
  %664 = vmatprep.subr.mxu0 0.0
  %665 = vmatpush1.msra.mxu0 0.0
  %666 = vmatprep.subr.mxu0 0.0
  %667 = vmatpush1.msra.mxu0 0.0
  %668 = vmatprep.subr.mxu0 0.0
  %669 = vmatpush1.msra.mxu0 0.0
  %670 = vmatprep.mubr.f32.mxu0 0.0
  %671 = vmatmul.mubr.f32.gmra.mrb[0].mxu0 %v525
  %v672 = vpop.f32.mrb[0].mxu0
  %v673 = vadd.f32 0.0, %v672
  %v674 = vpop.f32.mrb[0].mxu0
  %675 = vdwg.mxu0
  %v676 = vadd.f32 %v605, %v673
  %v677 = vxor.u32 %v676, 2147483648
  %v678 = vmul.f32 %v677, 1.442695
  %v679 = vpow.pop %v678
  %v680 = vadd.f32 %v679, 1.0
  %v681 = vrcp.pop %v680
  %v682 = vmul.f32 1.0, %v681
  %s683 = scalar_lea.vmem %s2, 4
  %v684 = vld [vmem:[%s683] sm:$0x3]
  %685 = vmatprep.subr.mxu0 0.0
  %686 = vmatpush1.msra.mxu0 %v30
  %687 = vmatprep.subr.mxu0 0.0
  %688 = vmatpush1.msra.mxu0 %v31
  %689 = vmatprep.subr.mxu0 0.0
  %690 = vmatpush1.msra.mxu0 %v32
  %691 = vmatprep.subr.mxu0 0.0
  %692 = vmatpush1.msra.mxu0 %v33
  %693 = vmatprep.subr.mxu0 0.0
  %694 = vmatpush1.msra.mxu0 0.0
  %695 = vmatprep.subr.mxu0 0.0
  %696 = vmatpush1.msra.mxu0 0.0
  %697 = vmatprep.subr.mxu0 0.0
  %698 = vmatpush1.msra.mxu0 0.0
  %699 = vmatprep.subr.mxu0 0.0
  %700 = vmatpush1.msra.mxu0 0.0
  %701 = vmatprep.subr.mxu0 0.0
  %702 = vmatpush1.msra.mxu0 0.0
  %703 = vmatprep.subr.mxu0 0.0
  %704 = vmatpush1.msra.mxu0 0.0
  %705 = vmatprep.subr.mxu0 0.0
  %706 = vmatpush1.msra.mxu0 0.0
  %707 = vmatprep.subr.mxu0 0.0
  %708 = vmatpush1.msra.mxu0 0.0
  %709 = vmatprep.subr.mxu0 0.0
  %710 = vmatpush1.msra.mxu0 0.0
  %711 = vmatprep.subr.mxu0 0.0
  %712 = vmatpush1.msra.mxu0 0.0
  %713 = vmatprep.subr.mxu0 0.0
  %714 = vmatpush1.msra.mxu0 0.0
  %715 = vmatprep.subr.mxu0 0.0
  %716 = vmatpush1.msra.mxu0 0.0
  %717 = vmatprep.subr.mxu0 0.0
  %718 = vmatpush1.msra.mxu0 0.0
  %719 = vmatprep.subr.mxu0 0.0
  %720 = vmatpush1.msra.mxu0 0.0
  %721 = vmatprep.subr.mxu0 0.0
  %722 = vmatpush1.msra.mxu0 0.0
  %723 = vmatprep.subr.mxu0 0.0
  %724 = vmatpush1.msra.mxu0 0.0
  %725 = vmatprep.subr.mxu0 0.0
  %726 = vmatpush1.msra.mxu0 0.0
  %727 = vmatprep.subr.mxu0 0.0
  %728 = vmatpush1.msra.mxu0 0.0
  %729 = vmatprep.subr.mxu0 0.0
  %730 = vmatpush1.msra.mxu0 0.0
  %731 = vmatprep.subr.mxu0 0.0
  %732 = vmatpush1.msra.mxu0 0.0
  %733 = vmatprep.subr.mxu0 0.0
  %734 = vmatpush1.msra.mxu0 0.0
  %735 = vmatprep.subr.mxu0 0.0
  %736 = vmatpush1.msra.mxu0 0.0
  %737 = vmatprep.subr.mxu0 0.0
  %738 = vmatpush1.msra.mxu0 0.0
  %739 = vmatprep.subr.mxu0 0.0
  %740 = vmatpush1.msra.mxu0 0.0
  %741 = vmatprep.subr.mxu0 0.0
  %742 = vmatpush1.msra.mxu0 0.0
  %743 = vmatprep.subr.mxu0 0.0
  %744 = vmatpush1.msra.mxu0 0.0
  %745 = vmatprep.subr.mxu0 0.0
  %746 = vmatpush1.msra.mxu0 0.0
  %747 = vmatprep.subr.mxu0 0.0
  %748 = vmatpush1.msra.mxu0 0.0
  %749 = vmatprep.mubr.f32.mxu0 0.0
  %750 = vmatmul.mubr.f32.gmra.mrb[0].mxu0 %v525
  %v751 = vpop.f32.mrb[0].mxu0
  %v752 = vadd.f32 %v200, %v751
  %v753 = vpop.f32.mrb[0].mxu0
  %754 = vdwg.mxu0
  %v755 = vmul.f32 %v603, %v752
  %v756 = vadd.f32 %v684, %v755
  %v757 = vtanh.pop %v756
  %v758 = vsub.f32 1.0, %v682
  %v759 = vmul.f32 %v758, %v757
  %v760 = vmul.f32 %v682, %v519
  %v761 = vadd.f32 %v759, %v760
  %v762 = vtanh.pop %v761
  %v763 = vmax.f32 %v521, %v762
  %s764 = scalar_lea.vmem %s0, 6
  %v765 = vld [vmem:[%s764] sm:$0x3]
  %v767 = vsel %vm36, %v761, 0
  %769 = vmatprep.subr.mxu0 0.0
  %770 = vmatpush1.msra.mxu0 %v20
  %771 = vmatprep.subr.mxu0 0.0
  %772 = vmatpush1.msra.mxu0 %v21
  %773 = vmatprep.subr.mxu0 0.0
  %774 = vmatpush1.msra.mxu0 %v22
  %775 = vmatprep.subr.mxu0 0.0
  %776 = vmatpush1.msra.mxu0 %v23
  %777 = vmatprep.subr.mxu0 0.0
  %778 = vmatpush1.msra.mxu0 0.0
  %779 = vmatprep.subr.mxu0 0.0
  %780 = vmatpush1.msra.mxu0 0.0
  %781 = vmatprep.subr.mxu0 0.0
  %782 = vmatpush1.msra.mxu0 0.0
  %783 = vmatprep.subr.mxu0 0.0
  %784 = vmatpush1.msra.mxu0 0.0
  %785 = vmatprep.subr.mxu0 0.0
  %786 = vmatpush1.msra.mxu0 0.0
  %787 = vmatprep.subr.mxu0 0.0
  %788 = vmatpush1.msra.mxu0 0.0
  %789 = vmatprep.subr.mxu0 0.0
  %790 = vmatpush1.msra.mxu0 0.0
  %791 = vmatprep.subr.mxu0 0.0
  %792 = vmatpush1.msra.mxu0 0.0
  %793 = vmatprep.subr.mxu0 0.0
  %794 = vmatpush1.msra.mxu0 0.0
  %795 = vmatprep.subr.mxu0 0.0
  %796 = vmatpush1.msra.mxu0 0.0
  %797 = vmatprep.subr.mxu0 0.0
  %798 = vmatpush1.msra.mxu0 0.0
  %799 = vmatprep.subr.mxu0 0.0
  %800 = vmatpush1.msra.mxu0 0.0
  %801 = vmatprep.subr.mxu0 0.0
  %802 = vmatpush1.msra.mxu0 0.0
  %803 = vmatprep.subr.mxu0 0.0
  %804 = vmatpush1.msra.mxu0 0.0
  %805 = vmatprep.subr.mxu0 0.0
  %806 = vmatpush1.msra.mxu0 0.0
  %807 = vmatprep.subr.mxu0 0.0
  %808 = vmatpush1.msra.mxu0 0.0
  %809 = vmatprep.subr.mxu0 0.0
  %810 = vmatpush1.msra.mxu0 0.0
  %811 = vmatprep.subr.mxu0 0.0
  %812 = vmatpush1.msra.mxu0 0.0
  %813 = vmatprep.subr.mxu0 0.0
  %814 = vmatpush1.msra.mxu0 0.0
  %815 = vmatprep.subr.mxu0 0.0
  %816 = vmatpush1.msra.mxu0 0.0
  %817 = vmatprep.subr.mxu0 0.0
  %818 = vmatpush1.msra.mxu0 0.0
  %819 = vmatprep.subr.mxu0 0.0
  %820 = vmatpush1.msra.mxu0 0.0
  %821 = vmatprep.subr.mxu0 0.0
  %822 = vmatpush1.msra.mxu0 0.0
  %823 = vmatprep.subr.mxu0 0.0
  %824 = vmatpush1.msra.mxu0 0.0
  %825 = vmatprep.subr.mxu0 0.0
  %826 = vmatpush1.msra.mxu0 0.0
  %827 = vmatprep.subr.mxu0 0.0
  %828 = vmatpush1.msra.mxu0 0.0
  %829 = vmatprep.subr.mxu0 0.0
  %830 = vmatpush1.msra.mxu0 0.0
  %831 = vmatprep.subr.mxu0 0.0
  %832 = vmatpush1.msra.mxu0 0.0
  %833 = vmatprep.mubr.f32.mxu0 0.0
  %834 = vmatmul.mubr.f32.gmra.mrb[0].mxu0 %v767
  %v835 = vpop.f32.mrb[0].mxu0
  %v836 = vadd.f32 0.0, %v835
  %v837 = vpop.f32.mrb[0].mxu0
  %838 = vdwg.mxu0
  %v839 = vadd.f32 %v765, %v836
  %v840 = vxor.u32 %v839, 2147483648
  %v841 = vmul.f32 %v840, 1.442695
  %v842 = vpow.pop %v841
  %v843 = vadd.f32 %v842, 1.0
  %v844 = vrcp.pop %v843
  %v845 = vmul.f32 1.0, %v844
  %s846 = scalar_lea.vmem %s1, 6
  %v847 = vld [vmem:[%s846] sm:$0x3]
  %848 = vmatprep.subr.mxu0 0.0
  %849 = vmatpush1.msra.mxu0 %v25
  %850 = vmatprep.subr.mxu0 0.0
  %851 = vmatpush1.msra.mxu0 %v26
  %852 = vmatprep.subr.mxu0 0.0
  %853 = vmatpush1.msra.mxu0 %v27
  %854 = vmatprep.subr.mxu0 0.0
  %855 = vmatpush1.msra.mxu0 %v28
  %856 = vmatprep.subr.mxu0 0.0
  %857 = vmatpush1.msra.mxu0 0.0
  %858 = vmatprep.subr.mxu0 0.0
  %859 = vmatpush1.msra.mxu0 0.0
  %860 = vmatprep.subr.mxu0 0.0
  %861 = vmatpush1.msra.mxu0 0.0
  %862 = vmatprep.subr.mxu0 0.0
  %863 = vmatpush1.msra.mxu0 0.0
  %864 = vmatprep.subr.mxu0 0.0
  %865 = vmatpush1.msra.mxu0 0.0
  %866 = vmatprep.subr.mxu0 0.0
  %867 = vmatpush1.msra.mxu0 0.0
  %868 = vmatprep.subr.mxu0 0.0
  %869 = vmatpush1.msra.mxu0 0.0
  %870 = vmatprep.subr.mxu0 0.0
  %871 = vmatpush1.msra.mxu0 0.0
  %872 = vmatprep.subr.mxu0 0.0
  %873 = vmatpush1.msra.mxu0 0.0
  %874 = vmatprep.subr.mxu0 0.0
  %875 = vmatpush1.msra.mxu0 0.0
  %876 = vmatprep.subr.mxu0 0.0
  %877 = vmatpush1.msra.mxu0 0.0
  %878 = vmatprep.subr.mxu0 0.0
  %879 = vmatpush1.msra.mxu0 0.0
  %880 = vmatprep.subr.mxu0 0.0
  %881 = vmatpush1.msra.mxu0 0.0
  %882 = vmatprep.subr.mxu0 0.0
  %883 = vmatpush1.msra.mxu0 0.0
  %884 = vmatprep.subr.mxu0 0.0
  %885 = vmatpush1.msra.mxu0 0.0
  %886 = vmatprep.subr.mxu0 0.0
  %887 = vmatpush1.msra.mxu0 0.0
  %888 = vmatprep.subr.mxu0 0.0
  %889 = vmatpush1.msra.mxu0 0.0
  %890 = vmatprep.subr.mxu0 0.0
  %891 = vmatpush1.msra.mxu0 0.0
  %892 = vmatprep.subr.mxu0 0.0
  %893 = vmatpush1.msra.mxu0 0.0
  %894 = vmatprep.subr.mxu0 0.0
  %895 = vmatpush1.msra.mxu0 0.0
  %896 = vmatprep.subr.mxu0 0.0
  %897 = vmatpush1.msra.mxu0 0.0
  %898 = vmatprep.subr.mxu0 0.0
  %899 = vmatpush1.msra.mxu0 0.0
  %900 = vmatprep.subr.mxu0 0.0
  %901 = vmatpush1.msra.mxu0 0.0
  %902 = vmatprep.subr.mxu0 0.0
  %903 = vmatpush1.msra.mxu0 0.0
  %904 = vmatprep.subr.mxu0 0.0
  %905 = vmatpush1.msra.mxu0 0.0
  %906 = vmatprep.subr.mxu0 0.0
  %907 = vmatpush1.msra.mxu0 0.0
  %908 = vmatprep.subr.mxu0 0.0
  %909 = vmatpush1.msra.mxu0 0.0
  %910 = vmatprep.subr.mxu0 0.0
  %911 = vmatpush1.msra.mxu0 0.0
  %912 = vmatprep.mubr.f32.mxu0 0.0
  %913 = vmatmul.mubr.f32.gmra.mrb[0].mxu0 %v767
  %v914 = vpop.f32.mrb[0].mxu0
  %v915 = vadd.f32 0.0, %v914
  %v916 = vpop.f32.mrb[0].mxu0
  %917 = vdwg.mxu0
  %v918 = vadd.f32 %v847, %v915
  %v919 = vxor.u32 %v918, 2147483648
  %v920 = vmul.f32 %v919, 1.442695
  %v921 = vpow.pop %v920
  %v922 = vadd.f32 %v921, 1.0
  %v923 = vrcp.pop %v922
  %v924 = vmul.f32 1.0, %v923
  %s925 = scalar_lea.vmem %s2, 6
  %v926 = vld [vmem:[%s925] sm:$0x3]
  %927 = vmatprep.subr.mxu0 0.0
  %928 = vmatpush1.msra.mxu0 %v30
  %929 = vmatprep.subr.mxu0 0.0
  %930 = vmatpush1.msra.mxu0 %v31
  %931 = vmatprep.subr.mxu0 0.0
  %932 = vmatpush1.msra.mxu0 %v32
  %933 = vmatprep.subr.mxu0 0.0
  %934 = vmatpush1.msra.mxu0 %v33
  %935 = vmatprep.subr.mxu0 0.0
  %936 = vmatpush1.msra.mxu0 0.0
  %937 = vmatprep.subr.mxu0 0.0
  %938 = vmatpush1.msra.mxu0 0.0
  %939 = vmatprep.subr.mxu0 0.0
  %940 = vmatpush1.msra.mxu0 0.0
  %941 = vmatprep.subr.mxu0 0.0
  %942 = vmatpush1.msra.mxu0 0.0
  %943 = vmatprep.subr.mxu0 0.0
  %944 = vmatpush1.msra.mxu0 0.0
  %945 = vmatprep.subr.mxu0 0.0
  %946 = vmatpush1.msra.mxu0 0.0
  %947 = vmatprep.subr.mxu0 0.0
  %948 = vmatpush1.msra.mxu0 0.0
  %949 = vmatprep.subr.mxu0 0.0
  %950 = vmatpush1.msra.mxu0 0.0
  %951 = vmatprep.subr.mxu0 0.0
  %952 = vmatpush1.msra.mxu0 0.0
  %953 = vmatprep.subr.mxu0 0.0
  %954 = vmatpush1.msra.mxu0 0.0
  %955 = vmatprep.subr.mxu0 0.0
  %956 = vmatpush1.msra.mxu0 0.0
  %957 = vmatprep.subr.mxu0 0.0
  %958 = vmatpush1.msra.mxu0 0.0
  %959 = vmatprep.subr.mxu0 0.0
  %960 = vmatpush1.msra.mxu0 0.0
  %961 = vmatprep.subr.mxu0 0.0
  %962 = vmatpush1.msra.mxu0 0.0
  %963 = vmatprep.subr.mxu0 0.0
  %964 = vmatpush1.msra.mxu0 0.0
  %965 = vmatprep.subr.mxu0 0.0
  %966 = vmatpush1.msra.mxu0 0.0
  %967 = vmatprep.subr.mxu0 0.0
  %968 = vmatpush1.msra.mxu0 0.0
  %969 = vmatprep.subr.mxu0 0.0
  %970 = vmatpush1.msra.mxu0 0.0
  %971 = vmatprep.subr.mxu0 0.0
  %972 = vmatpush1.msra.mxu0 0.0
  %973 = vmatprep.subr.mxu0 0.0
  %974 = vmatpush1.msra.mxu0 0.0
  %975 = vmatprep.subr.mxu0 0.0
  %976 = vmatpush1.msra.mxu0 0.0
  %977 = vmatprep.subr.mxu0 0.0
  %978 = vmatpush1.msra.mxu0 0.0
  %979 = vmatprep.subr.mxu0 0.0
  %980 = vmatpush1.msra.mxu0 0.0
  %981 = vmatprep.subr.mxu0 0.0
  %982 = vmatpush1.msra.mxu0 0.0
  %983 = vmatprep.subr.mxu0 0.0
  %984 = vmatpush1.msra.mxu0 0.0
  %985 = vmatprep.subr.mxu0 0.0
  %986 = vmatpush1.msra.mxu0 0.0
  %987 = vmatprep.subr.mxu0 0.0
  %988 = vmatpush1.msra.mxu0 0.0
  %989 = vmatprep.subr.mxu0 0.0
  %990 = vmatpush1.msra.mxu0 0.0
  %991 = vmatprep.mubr.f32.mxu0 0.0
  %992 = vmatmul.mubr.f32.gmra.mrb[0].mxu0 %v767
  %v993 = vpop.f32.mrb[0].mxu0
  %v994 = vadd.f32 %v200, %v993
  %v995 = vpop.f32.mrb[0].mxu0
  %996 = vdwg.mxu0
  %v997 = vmul.f32 %v845, %v994
  %v998 = vadd.f32 %v926, %v997
  %v999 = vtanh.pop %v998
  %v1000 = vsub.f32 1.0, %v924
  %v1001 = vmul.f32 %v1000, %v999
  %v1002 = vmul.f32 %v924, %v761
  %v1003 = vadd.f32 %v1001, %v1002
  %v1004 = vtanh.pop %v1003
  %v1005 = vmax.f32 %v763, %v1004
  %s1006 = scalar_lea.vmem %s0, 8
  %v1007 = vld [vmem:[%s1006] sm:$0x3]
  %v1009 = vsel %vm36, %v1003, 0
  %1011 = vmatprep.subr.mxu0 0.0
  %1012 = vmatpush1.msra.mxu0 %v20
  %1013 = vmatprep.subr.mxu0 0.0
  %1014 = vmatpush1.msra.mxu0 %v21
  %1015 = vmatprep.subr.mxu0 0.0
  %1016 = vmatpush1.msra.mxu0 %v22
  %1017 = vmatprep.subr.mxu0 0.0
  %1018 = vmatpush1.msra.mxu0 %v23
  %1019 = vmatprep.subr.mxu0 0.0
  %1020 = vmatpush1.msra.mxu0 0.0
  %1021 = vmatprep.subr.mxu0 0.0
  %1022 = vmatpush1.msra.mxu0 0.0
  %1023 = vmatprep.subr.mxu0 0.0
  %1024 = vmatpush1.msra.mxu0 0.0
  %1025 = vmatprep.subr.mxu0 0.0
  %1026 = vmatpush1.msra.mxu0 0.0
  %1027 = vmatprep.subr.mxu0 0.0
  %1028 = vmatpush1.msra.mxu0 0.0
  %1029 = vmatprep.subr.mxu0 0.0
  %1030 = vmatpush1.msra.mxu0 0.0
  %1031 = vmatprep.subr.mxu0 0.0
  %1032 = vmatpush1.msra.mxu0 0.0
  %1033 = vmatprep.subr.mxu0 0.0
  %1034 = vmatpush1.msra.mxu0 0.0
  %1035 = vmatprep.subr.mxu0 0.0
  %1036 = vmatpush1.msra.mxu0 0.0
  %1037 = vmatprep.subr.mxu0 0.0
  %1038 = vmatpush1.msra.mxu0 0.0
  %1039 = vmatprep.subr.mxu0 0.0
  %1040 = vmatpush1.msra.mxu0 0.0
  %1041 = vmatprep.subr.mxu0 0.0
  %1042 = vmatpush1.msra.mxu0 0.0
  %1043 = vmatprep.subr.mxu0 0.0
  %1044 = vmatpush1.msra.mxu0 0.0
  %1045 = vmatprep.subr.mxu0 0.0
  %1046 = vmatpush1.msra.mxu0 0.0
  %1047 = vmatprep.subr.mxu0 0.0
  %1048 = vmatpush1.msra.mxu0 0.0
  %1049 = vmatprep.subr.mxu0 0.0
  %1050 = vmatpush1.msra.mxu0 0.0
  %1051 = vmatprep.subr.mxu0 0.0
  %1052 = vmatpush1.msra.mxu0 0.0
  %1053 = vmatprep.subr.mxu0 0.0
  %1054 = vmatpush1.msra.mxu0 0.0
  %1055 = vmatprep.subr.mxu0 0.0
  %1056 = vmatpush1.msra.mxu0 0.0
  %1057 = vmatprep.subr.mxu0 0.0
  %1058 = vmatpush1.msra.mxu0 0.0
  %1059 = vmatprep.subr.mxu0 0.0
  %1060 = vmatpush1.msra.mxu0 0.0
  %1061 = vmatprep.subr.mxu0 0.0
  %1062 = vmatpush1.msra.mxu0 0.0
  %1063 = vmatprep.subr.mxu0 0.0
  %1064 = vmatpush1.msra.mxu0 0.0
  %1065 = vmatprep.subr.mxu0 0.0
  %1066 = vmatpush1.msra.mxu0 0.0
  %1067 = vmatprep.subr.mxu0 0.0
  %1068 = vmatpush1.msra.mxu0 0.0
  %1069 = vmatprep.subr.mxu0 0.0
  %1070 = vmatpush1.msra.mxu0 0.0
  %1071 = vmatprep.subr.mxu0 0.0
  %1072 = vmatpush1.msra.mxu0 0.0
  %1073 = vmatprep.subr.mxu0 0.0
  %1074 = vmatpush1.msra.mxu0 0.0
  %1075 = vmatprep.mubr.f32.mxu0 0.0
  %1076 = vmatmul.mubr.f32.gmra.mrb[0].mxu0 %v1009
  %v1077 = vpop.f32.mrb[0].mxu0
  %v1078 = vadd.f32 0.0, %v1077
  %v1079 = vpop.f32.mrb[0].mxu0
  %1080 = vdwg.mxu0
  %v1081 = vadd.f32 %v1007, %v1078
  %v1082 = vxor.u32 %v1081, 2147483648
  %v1083 = vmul.f32 %v1082, 1.442695
  %v1084 = vpow.pop %v1083
  %v1085 = vadd.f32 %v1084, 1.0
  %v1086 = vrcp.pop %v1085
  %v1087 = vmul.f32 1.0, %v1086
  %s1088 = scalar_lea.vmem %s1, 8
  %v1089 = vld [vmem:[%s1088] sm:$0x3]
  %1090 = vmatprep.subr.mxu0 0.0
  %1091 = vmatpush1.msra.mxu0 %v25
  %1092 = vmatprep.subr.mxu0 0.0
  %1093 = vmatpush1.msra.mxu0 %v26
  %1094 = vmatprep.subr.mxu0 0.0
  %1095 = vmatpush1.msra.mxu0 %v27
  %1096 = vmatprep.subr.mxu0 0.0
  %1097 = vmatpush1.msra.mxu0 %v28
  %1098 = vmatprep.subr.mxu0 0.0
  %1099 = vmatpush1.msra.mxu0 0.0
  %1100 = vmatprep.subr.mxu0 0.0
  %1101 = vmatpush1.msra.mxu0 0.0
  %1102 = vmatprep.subr.mxu0 0.0
  %1103 = vmatpush1.msra.mxu0 0.0
  %1104 = vmatprep.subr.mxu0 0.0
  %1105 = vmatpush1.msra.mxu0 0.0
  %1106 = vmatprep.subr.mxu0 0.0
  %1107 = vmatpush1.msra.mxu0 0.0
  %1108 = vmatprep.subr.mxu0 0.0
  %1109 = vmatpush1.msra.mxu0 0.0
  %1110 = vmatprep.subr.mxu0 0.0
  %1111 = vmatpush1.msra.mxu0 0.0
  %1112 = vmatprep.subr.mxu0 0.0
  %1113 = vmatpush1.msra.mxu0 0.0
  %1114 = vmatprep.subr.mxu0 0.0
  %1115 = vmatpush1.msra.mxu0 0.0
  %1116 = vmatprep.subr.mxu0 0.0
  %1117 = vmatpush1.msra.mxu0 0.0
  %1118 = vmatprep.subr.mxu0 0.0
  %1119 = vmatpush1.msra.mxu0 0.0
  %1120 = vmatprep.subr.mxu0 0.0
  %1121 = vmatpush1.msra.mxu0 0.0
  %1122 = vmatprep.subr.mxu0 0.0
  %1123 = vmatpush1.msra.mxu0 0.0
  %1124 = vmatprep.subr.mxu0 0.0
  %1125 = vmatpush1.msra.mxu0 0.0
  %1126 = vmatprep.subr.mxu0 0.0
  %1127 = vmatpush1.msra.mxu0 0.0
  %1128 = vmatprep.subr.mxu0 0.0
  %1129 = vmatpush1.msra.mxu0 0.0
  %1130 = vmatprep.subr.mxu0 0.0
  %1131 = vmatpush1.msra.mxu0 0.0
  %1132 = vmatprep.subr.mxu0 0.0
  %1133 = vmatpush1.msra.mxu0 0.0
  %1134 = vmatprep.subr.mxu0 0.0
  %1135 = vmatpush1.msra.mxu0 0.0
  %1136 = vmatprep.subr.mxu0 0.0
  %1137 = vmatpush1.msra.mxu0 0.0
  %1138 = vmatprep.subr.mxu0 0.0
  %1139 = vmatpush1.msra.mxu0 0.0
  %1140 = vmatprep.subr.mxu0 0.0
  %1141 = vmatpush1.msra.mxu0 0.0
  %1142 = vmatprep.subr.mxu0 0.0
  %1143 = vmatpush1.msra.mxu0 0.0
  %1144 = vmatprep.subr.mxu0 0.0
  %1145 = vmatpush1.msra.mxu0 0.0
  %1146 = vmatprep.subr.mxu0 0.0
  %1147 = vmatpush1.msra.mxu0 0.0
  %1148 = vmatprep.subr.mxu0 0.0
  %1149 = vmatpush1.msra.mxu0 0.0
  %1150 = vmatprep.subr.mxu0 0.0
  %1151 = vmatpush1.msra.mxu0 0.0
  %1152 = vmatprep.subr.mxu0 0.0
  %1153 = vmatpush1.msra.mxu0 0.0
  %1154 = vmatprep.mubr.f32.mxu0 0.0
  %1155 = vmatmul.mubr.f32.gmra.mrb[0].mxu0 %v1009
  %v1156 = vpop.f32.mrb[0].mxu0
  %v1157 = vadd.f32 0.0, %v1156
  %v1158 = vpop.f32.mrb[0].mxu0
  %1159 = vdwg.mxu0
  %v1160 = vadd.f32 %v1089, %v1157
  %v1161 = vxor.u32 %v1160, 2147483648
  %v1162 = vmul.f32 %v1161, 1.442695
  %v1163 = vpow.pop %v1162
  %v1164 = vadd.f32 %v1163, 1.0
  %v1165 = vrcp.pop %v1164
  %v1166 = vmul.f32 1.0, %v1165
  %s1167 = scalar_lea.vmem %s2, 8
  %v1168 = vld [vmem:[%s1167] sm:$0x3]
  %1169 = vmatprep.subr.mxu0 0.0
  %1170 = vmatpush1.msra.mxu0 %v30
  %1171 = vmatprep.subr.mxu0 0.0
  %1172 = vmatpush1.msra.mxu0 %v31
  %1173 = vmatprep.subr.mxu0 0.0
  %1174 = vmatpush1.msra.mxu0 %v32
  %1175 = vmatprep.subr.mxu0 0.0
  %1176 = vmatpush1.msra.mxu0 %v33
  %1177 = vmatprep.subr.mxu0 0.0
  %1178 = vmatpush1.msra.mxu0 0.0
  %1179 = vmatprep.subr.mxu0 0.0
  %1180 = vmatpush1.msra.mxu0 0.0
  %1181 = vmatprep.subr.mxu0 0.0
  %1182 = vmatpush1.msra.mxu0 0.0
  %1183 = vmatprep.subr.mxu0 0.0
  %1184 = vmatpush1.msra.mxu0 0.0
  %1185 = vmatprep.subr.mxu0 0.0
  %1186 = vmatpush1.msra.mxu0 0.0
  %1187 = vmatprep.subr.mxu0 0.0
  %1188 = vmatpush1.msra.mxu0 0.0
  %1189 = vmatprep.subr.mxu0 0.0
  %1190 = vmatpush1.msra.mxu0 0.0
  %1191 = vmatprep.subr.mxu0 0.0
  %1192 = vmatpush1.msra.mxu0 0.0
  %1193 = vmatprep.subr.mxu0 0.0
  %1194 = vmatpush1.msra.mxu0 0.0
  %1195 = vmatprep.subr.mxu0 0.0
  %1196 = vmatpush1.msra.mxu0 0.0
  %1197 = vmatprep.subr.mxu0 0.0
  %1198 = vmatpush1.msra.mxu0 0.0
  %1199 = vmatprep.subr.mxu0 0.0
  %1200 = vmatpush1.msra.mxu0 0.0
  %1201 = vmatprep.subr.mxu0 0.0
  %1202 = vmatpush1.msra.mxu0 0.0
  %1203 = vmatprep.subr.mxu0 0.0
  %1204 = vmatpush1.msra.mxu0 0.0
  %1205 = vmatprep.subr.mxu0 0.0
  %1206 = vmatpush1.msra.mxu0 0.0
  %1207 = vmatprep.subr.mxu0 0.0
  %1208 = vmatpush1.msra.mxu0 0.0
  %1209 = vmatprep.subr.mxu0 0.0
  %1210 = vmatpush1.msra.mxu0 0.0
  %1211 = vmatprep.subr.mxu0 0.0
  %1212 = vmatpush1.msra.mxu0 0.0
  %1213 = vmatprep.subr.mxu0 0.0
  %1214 = vmatpush1.msra.mxu0 0.0
  %1215 = vmatprep.subr.mxu0 0.0
  %1216 = vmatpush1.msra.mxu0 0.0
  %1217 = vmatprep.subr.mxu0 0.0
  %1218 = vmatpush1.msra.mxu0 0.0
  %1219 = vmatprep.subr.mxu0 0.0
  %1220 = vmatpush1.msra.mxu0 0.0
  %1221 = vmatprep.subr.mxu0 0.0
  %1222 = vmatpush1.msra.mxu0 0.0
  %1223 = vmatprep.subr.mxu0 0.0
  %1224 = vmatpush1.msra.mxu0 0.0
  %1225 = vmatprep.subr.mxu0 0.0
  %1226 = vmatpush1.msra.mxu0 0.0
  %1227 = vmatprep.subr.mxu0 0.0
  %1228 = vmatpush1.msra.mxu0 0.0
  %1229 = vmatprep.subr.mxu0 0.0
  %1230 = vmatpush1.msra.mxu0 0.0
  %1231 = vmatprep.subr.mxu0 0.0
  %1232 = vmatpush1.msra.mxu0 0.0
  %1233 = vmatprep.mubr.f32.mxu0 0.0
  %1234 = vmatmul.mubr.f32.gmra.mrb[0].mxu0 %v1009
  %v1235 = vpop.f32.mrb[0].mxu0
  %v1236 = vadd.f32 %v200, %v1235
  %v1237 = vpop.f32.mrb[0].mxu0
  %1238 = vdwg.mxu0
  %v1239 = vmul.f32 %v1087, %v1236
  %v1240 = vadd.f32 %v1168, %v1239
  %v1241 = vtanh.pop %v1240
  %v1242 = vsub.f32 1.0, %v1166
  %v1243 = vmul.f32 %v1242, %v1241
  %v1244 = vmul.f32 %v1166, %v1003
  %v1245 = vadd.f32 %v1243, %v1244
  %v1246 = vtanh.pop %v1245
  %v1247 = vmax.f32 %v1005, %v1246
  %s1248 = scalar_lea.vmem %s0, 10
  %v1249 = vld [vmem:[%s1248] sm:$0x3]
  %v1251 = vsel %vm36, %v1245, 0
  %1253 = vmatprep.subr.mxu0 0.0
  %1254 = vmatpush1.msra.mxu0 %v20
  %1255 = vmatprep.subr.mxu0 0.0
  %1256 = vmatpush1.msra.mxu0 %v21
  %1257 = vmatprep.subr.mxu0 0.0
  %1258 = vmatpush1.msra.mxu0 %v22
  %1259 = vmatprep.subr.mxu0 0.0
  %1260 = vmatpush1.msra.mxu0 %v23
  %1261 = vmatprep.subr.mxu0 0.0
  %1262 = vmatpush1.msra.mxu0 0.0
  %1263 = vmatprep.subr.mxu0 0.0
  %1264 = vmatpush1.msra.mxu0 0.0
  %1265 = vmatprep.subr.mxu0 0.0
  %1266 = vmatpush1.msra.mxu0 0.0
  %1267 = vmatprep.subr.mxu0 0.0
  %1268 = vmatpush1.msra.mxu0 0.0
  %1269 = vmatprep.subr.mxu0 0.0
  %1270 = vmatpush1.msra.mxu0 0.0
  %1271 = vmatprep.subr.mxu0 0.0
  %1272 = vmatpush1.msra.mxu0 0.0
  %1273 = vmatprep.subr.mxu0 0.0
  %1274 = vmatpush1.msra.mxu0 0.0
  %1275 = vmatprep.subr.mxu0 0.0
  %1276 = vmatpush1.msra.mxu0 0.0
  %1277 = vmatprep.subr.mxu0 0.0
  %1278 = vmatpush1.msra.mxu0 0.0
  %1279 = vmatprep.subr.mxu0 0.0
  %1280 = vmatpush1.msra.mxu0 0.0
  %1281 = vmatprep.subr.mxu0 0.0
  %1282 = vmatpush1.msra.mxu0 0.0
  %1283 = vmatprep.subr.mxu0 0.0
  %1284 = vmatpush1.msra.mxu0 0.0
  %1285 = vmatprep.subr.mxu0 0.0
  %1286 = vmatpush1.msra.mxu0 0.0
  %1287 = vmatprep.subr.mxu0 0.0
  %1288 = vmatpush1.msra.mxu0 0.0
  %1289 = vmatprep.subr.mxu0 0.0
  %1290 = vmatpush1.msra.mxu0 0.0
  %1291 = vmatprep.subr.mxu0 0.0
  %1292 = vmatpush1.msra.mxu0 0.0
  %1293 = vmatprep.subr.mxu0 0.0
  %1294 = vmatpush1.msra.mxu0 0.0
  %1295 = vmatprep.subr.mxu0 0.0
  %1296 = vmatpush1.msra.mxu0 0.0
  %1297 = vmatprep.subr.mxu0 0.0
  %1298 = vmatpush1.msra.mxu0 0.0
  %1299 = vmatprep.subr.mxu0 0.0
  %1300 = vmatpush1.msra.mxu0 0.0
  %1301 = vmatprep.subr.mxu0 0.0
  %1302 = vmatpush1.msra.mxu0 0.0
  %1303 = vmatprep.subr.mxu0 0.0
  %1304 = vmatpush1.msra.mxu0 0.0
  %1305 = vmatprep.subr.mxu0 0.0
  %1306 = vmatpush1.msra.mxu0 0.0
  %1307 = vmatprep.subr.mxu0 0.0
  %1308 = vmatpush1.msra.mxu0 0.0
  %1309 = vmatprep.subr.mxu0 0.0
  %1310 = vmatpush1.msra.mxu0 0.0
  %1311 = vmatprep.subr.mxu0 0.0
  %1312 = vmatpush1.msra.mxu0 0.0
  %1313 = vmatprep.subr.mxu0 0.0
  %1314 = vmatpush1.msra.mxu0 0.0
  %1315 = vmatprep.subr.mxu0 0.0
  %1316 = vmatpush1.msra.mxu0 0.0
  %1317 = vmatprep.mubr.f32.mxu0 0.0
  %1318 = vmatmul.mubr.f32.gmra.mrb[0].mxu0 %v1251
  %v1319 = vpop.f32.mrb[0].mxu0
  %v1320 = vadd.f32 0.0, %v1319
  %v1321 = vpop.f32.mrb[0].mxu0
  %1322 = vdwg.mxu0
  %v1323 = vadd.f32 %v1249, %v1320
  %v1324 = vxor.u32 %v1323, 2147483648
  %v1325 = vmul.f32 %v1324, 1.442695
  %v1326 = vpow.pop %v1325
  %v1327 = vadd.f32 %v1326, 1.0
  %v1328 = vrcp.pop %v1327
  %v1329 = vmul.f32 1.0, %v1328
  %s1330 = scalar_lea.vmem %s1, 10
  %v1331 = vld [vmem:[%s1330] sm:$0x3]
  %1332 = vmatprep.subr.mxu0 0.0
  %1333 = vmatpush1.msra.mxu0 %v25
  %1334 = vmatprep.subr.mxu0 0.0
  %1335 = vmatpush1.msra.mxu0 %v26
  %1336 = vmatprep.subr.mxu0 0.0
  %1337 = vmatpush1.msra.mxu0 %v27
  %1338 = vmatprep.subr.mxu0 0.0
  %1339 = vmatpush1.msra.mxu0 %v28
  %1340 = vmatprep.subr.mxu0 0.0
  %1341 = vmatpush1.msra.mxu0 0.0
  %1342 = vmatprep.subr.mxu0 0.0
  %1343 = vmatpush1.msra.mxu0 0.0
  %1344 = vmatprep.subr.mxu0 0.0
  %1345 = vmatpush1.msra.mxu0 0.0
  %1346 = vmatprep.subr.mxu0 0.0
  %1347 = vmatpush1.msra.mxu0 0.0
  %1348 = vmatprep.subr.mxu0 0.0
  %1349 = vmatpush1.msra.mxu0 0.0
  %1350 = vmatprep.subr.mxu0 0.0
  %1351 = vmatpush1.msra.mxu0 0.0
  %1352 = vmatprep.subr.mxu0 0.0
  %1353 = vmatpush1.msra.mxu0 0.0
  %1354 = vmatprep.subr.mxu0 0.0
  %1355 = vmatpush1.msra.mxu0 0.0
  %1356 = vmatprep.subr.mxu0 0.0
  %1357 = vmatpush1.msra.mxu0 0.0
  %1358 = vmatprep.subr.mxu0 0.0
  %1359 = vmatpush1.msra.mxu0 0.0
  %1360 = vmatprep.subr.mxu0 0.0
  %1361 = vmatpush1.msra.mxu0 0.0
  %1362 = vmatprep.subr.mxu0 0.0
  %1363 = vmatpush1.msra.mxu0 0.0
  %1364 = vmatprep.subr.mxu0 0.0
  %1365 = vmatpush1.msra.mxu0 0.0
  %1366 = vmatprep.subr.mxu0 0.0
  %1367 = vmatpush1.msra.mxu0 0.0
  %1368 = vmatprep.subr.mxu0 0.0
  %1369 = vmatpush1.msra.mxu0 0.0
  %1370 = vmatprep.subr.mxu0 0.0
  %1371 = vmatpush1.msra.mxu0 0.0
  %1372 = vmatprep.subr.mxu0 0.0
  %1373 = vmatpush1.msra.mxu0 0.0
  %1374 = vmatprep.subr.mxu0 0.0
  %1375 = vmatpush1.msra.mxu0 0.0
  %1376 = vmatprep.subr.mxu0 0.0
  %1377 = vmatpush1.msra.mxu0 0.0
  %1378 = vmatprep.subr.mxu0 0.0
  %1379 = vmatpush1.msra.mxu0 0.0
  %1380 = vmatprep.subr.mxu0 0.0
  %1381 = vmatpush1.msra.mxu0 0.0
  %1382 = vmatprep.subr.mxu0 0.0
  %1383 = vmatpush1.msra.mxu0 0.0
  %1384 = vmatprep.subr.mxu0 0.0
  %1385 = vmatpush1.msra.mxu0 0.0
  %1386 = vmatprep.subr.mxu0 0.0
  %1387 = vmatpush1.msra.mxu0 0.0
  %1388 = vmatprep.subr.mxu0 0.0
  %1389 = vmatpush1.msra.mxu0 0.0
  %1390 = vmatprep.subr.mxu0 0.0
  %1391 = vmatpush1.msra.mxu0 0.0
  %1392 = vmatprep.subr.mxu0 0.0
  %1393 = vmatpush1.msra.mxu0 0.0
  %1394 = vmatprep.subr.mxu0 0.0
  %1395 = vmatpush1.msra.mxu0 0.0
  %1396 = vmatprep.mubr.f32.mxu0 0.0
  %1397 = vmatmul.mubr.f32.gmra.mrb[0].mxu0 %v1251
  %v1398 = vpop.f32.mrb[0].mxu0
  %v1399 = vadd.f32 0.0, %v1398
  %v1400 = vpop.f32.mrb[0].mxu0
  %1401 = vdwg.mxu0
  %v1402 = vadd.f32 %v1331, %v1399
  %v1403 = vxor.u32 %v1402, 2147483648
  %v1404 = vmul.f32 %v1403, 1.442695
  %v1405 = vpow.pop %v1404
  %v1406 = vadd.f32 %v1405, 1.0
  %v1407 = vrcp.pop %v1406
  %v1408 = vmul.f32 1.0, %v1407
  %s1409 = scalar_lea.vmem %s2, 10
  %v1410 = vld [vmem:[%s1409] sm:$0x3]
  %1411 = vmatprep.subr.mxu0 0.0
  %1412 = vmatpush1.msra.mxu0 %v30
  %1413 = vmatprep.subr.mxu0 0.0
  %1414 = vmatpush1.msra.mxu0 %v31
  %1415 = vmatprep.subr.mxu0 0.0
  %1416 = vmatpush1.msra.mxu0 %v32
  %1417 = vmatprep.subr.mxu0 0.0
  %1418 = vmatpush1.msra.mxu0 %v33
  %1419 = vmatprep.subr.mxu0 0.0
  %1420 = vmatpush1.msra.mxu0 0.0
  %1421 = vmatprep.subr.mxu0 0.0
  %1422 = vmatpush1.msra.mxu0 0.0
  %1423 = vmatprep.subr.mxu0 0.0
  %1424 = vmatpush1.msra.mxu0 0.0
  %1425 = vmatprep.subr.mxu0 0.0
  %1426 = vmatpush1.msra.mxu0 0.0
  %1427 = vmatprep.subr.mxu0 0.0
  %1428 = vmatpush1.msra.mxu0 0.0
  %1429 = vmatprep.subr.mxu0 0.0
  %1430 = vmatpush1.msra.mxu0 0.0
  %1431 = vmatprep.subr.mxu0 0.0
  %1432 = vmatpush1.msra.mxu0 0.0
  %1433 = vmatprep.subr.mxu0 0.0
  %1434 = vmatpush1.msra.mxu0 0.0
  %1435 = vmatprep.subr.mxu0 0.0
  %1436 = vmatpush1.msra.mxu0 0.0
  %1437 = vmatprep.subr.mxu0 0.0
  %1438 = vmatpush1.msra.mxu0 0.0
  %1439 = vmatprep.subr.mxu0 0.0
  %1440 = vmatpush1.msra.mxu0 0.0
  %1441 = vmatprep.subr.mxu0 0.0
  %1442 = vmatpush1.msra.mxu0 0.0
  %1443 = vmatprep.subr.mxu0 0.0
  %1444 = vmatpush1.msra.mxu0 0.0
  %1445 = vmatprep.subr.mxu0 0.0
  %1446 = vmatpush1.msra.mxu0 0.0
  %1447 = vmatprep.subr.mxu0 0.0
  %1448 = vmatpush1.msra.mxu0 0.0
  %1449 = vmatprep.subr.mxu0 0.0
  %1450 = vmatpush1.msra.mxu0 0.0
  %1451 = vmatprep.subr.mxu0 0.0
  %1452 = vmatpush1.msra.mxu0 0.0
  %1453 = vmatprep.subr.mxu0 0.0
  %1454 = vmatpush1.msra.mxu0 0.0
  %1455 = vmatprep.subr.mxu0 0.0
  %1456 = vmatpush1.msra.mxu0 0.0
  %1457 = vmatprep.subr.mxu0 0.0
  %1458 = vmatpush1.msra.mxu0 0.0
  %1459 = vmatprep.subr.mxu0 0.0
  %1460 = vmatpush1.msra.mxu0 0.0
  %1461 = vmatprep.subr.mxu0 0.0
  %1462 = vmatpush1.msra.mxu0 0.0
  %1463 = vmatprep.subr.mxu0 0.0
  %1464 = vmatpush1.msra.mxu0 0.0
  %1465 = vmatprep.subr.mxu0 0.0
  %1466 = vmatpush1.msra.mxu0 0.0
  %1467 = vmatprep.subr.mxu0 0.0
  %1468 = vmatpush1.msra.mxu0 0.0
  %1469 = vmatprep.subr.mxu0 0.0
  %1470 = vmatpush1.msra.mxu0 0.0
  %1471 = vmatprep.subr.mxu0 0.0
  %1472 = vmatpush1.msra.mxu0 0.0
  %1473 = vmatprep.subr.mxu0 0.0
  %1474 = vmatpush1.msra.mxu0 0.0
  %1475 = vmatprep.mubr.f32.mxu0 0.0
  %1476 = vmatmul.mubr.f32.gmra.mrb[0].mxu0 %v1251
  %v1477 = vpop.f32.mrb[0].mxu0
  %v1478 = vadd.f32 %v200, %v1477
  %v1479 = vpop.f32.mrb[0].mxu0
  %1480 = vdwg.mxu0
  %v1481 = vmul.f32 %v1329, %v1478
  %v1482 = vadd.f32 %v1410, %v1481
  %v1483 = vtanh.pop %v1482
  %v1484 = vsub.f32 1.0, %v1408
  %v1485 = vmul.f32 %v1484, %v1483
  %v1486 = vmul.f32 %v1408, %v1245
  %v1487 = vadd.f32 %v1485, %v1486
  %v1488 = vtanh.pop %v1487
  %v1489 = vmax.f32 %v1247, %v1488
  %s1490 = scalar_lea.vmem %s0, 12
  %v1491 = vld [vmem:[%s1490] sm:$0x3]
  %v1493 = vsel %vm36, %v1487, 0
  %1495 = vmatprep.subr.mxu0 0.0
  %1496 = vmatpush1.msra.mxu0 %v20
  %1497 = vmatprep.subr.mxu0 0.0
  %1498 = vmatpush1.msra.mxu0 %v21
  %1499 = vmatprep.subr.mxu0 0.0
  %1500 = vmatpush1.msra.mxu0 %v22
  %1501 = vmatprep.subr.mxu0 0.0
  %1502 = vmatpush1.msra.mxu0 %v23
  %1503 = vmatprep.subr.mxu0 0.0
  %1504 = vmatpush1.msra.mxu0 0.0
  %1505 = vmatprep.subr.mxu0 0.0
  %1506 = vmatpush1.msra.mxu0 0.0
  %1507 = vmatprep.subr.mxu0 0.0
  %1508 = vmatpush1.msra.mxu0 0.0
  %1509 = vmatprep.subr.mxu0 0.0
  %1510 = vmatpush1.msra.mxu0 0.0
  %1511 = vmatprep.subr.mxu0 0.0
  %1512 = vmatpush1.msra.mxu0 0.0
  %1513 = vmatprep.subr.mxu0 0.0
  %1514 = vmatpush1.msra.mxu0 0.0
  %1515 = vmatprep.subr.mxu0 0.0
  %1516 = vmatpush1.msra.mxu0 0.0
  %1517 = vmatprep.subr.mxu0 0.0
  %1518 = vmatpush1.msra.mxu0 0.0
  %1519 = vmatprep.subr.mxu0 0.0
  %1520 = vmatpush1.msra.mxu0 0.0
  %1521 = vmatprep.subr.mxu0 0.0
  %1522 = vmatpush1.msra.mxu0 0.0
  %1523 = vmatprep.subr.mxu0 0.0
  %1524 = vmatpush1.msra.mxu0 0.0
  %1525 = vmatprep.subr.mxu0 0.0
  %1526 = vmatpush1.msra.mxu0 0.0
  %1527 = vmatprep.subr.mxu0 0.0
  %1528 = vmatpush1.msra.mxu0 0.0
  %1529 = vmatprep.subr.mxu0 0.0
  %1530 = vmatpush1.msra.mxu0 0.0
  %1531 = vmatprep.subr.mxu0 0.0
  %1532 = vmatpush1.msra.mxu0 0.0
  %1533 = vmatprep.subr.mxu0 0.0
  %1534 = vmatpush1.msra.mxu0 0.0
  %1535 = vmatprep.subr.mxu0 0.0
  %1536 = vmatpush1.msra.mxu0 0.0
  %1537 = vmatprep.subr.mxu0 0.0
  %1538 = vmatpush1.msra.mxu0 0.0
  %1539 = vmatprep.subr.mxu0 0.0
  %1540 = vmatpush1.msra.mxu0 0.0
  %1541 = vmatprep.subr.mxu0 0.0
  %1542 = vmatpush1.msra.mxu0 0.0
  %1543 = vmatprep.subr.mxu0 0.0
  %1544 = vmatpush1.msra.mxu0 0.0
  %1545 = vmatprep.subr.mxu0 0.0
  %1546 = vmatpush1.msra.mxu0 0.0
  %1547 = vmatprep.subr.mxu0 0.0
  %1548 = vmatpush1.msra.mxu0 0.0
  %1549 = vmatprep.subr.mxu0 0.0
  %1550 = vmatpush1.msra.mxu0 0.0
  %1551 = vmatprep.subr.mxu0 0.0
  %1552 = vmatpush1.msra.mxu0 0.0
  %1553 = vmatprep.subr.mxu0 0.0
  %1554 = vmatpush1.msra.mxu0 0.0
  %1555 = vmatprep.subr.mxu0 0.0
  %1556 = vmatpush1.msra.mxu0 0.0
  %1557 = vmatprep.subr.mxu0 0.0
  %1558 = vmatpush1.msra.mxu0 0.0
  %1559 = vmatprep.mubr.f32.mxu0 0.0
  %1560 = vmatmul.mubr.f32.gmra.mrb[0].mxu0 %v1493
  %v1561 = vpop.f32.mrb[0].mxu0
  %v1562 = vadd.f32 0.0, %v1561
  %v1563 = vpop.f32.mrb[0].mxu0
  %1564 = vdwg.mxu0
  %v1565 = vadd.f32 %v1491, %v1562
  %v1566 = vxor.u32 %v1565, 2147483648
  %v1567 = vmul.f32 %v1566, 1.442695
  %v1568 = vpow.pop %v1567
  %v1569 = vadd.f32 %v1568, 1.0
  %v1570 = vrcp.pop %v1569
  %v1571 = vmul.f32 1.0, %v1570
  %s1572 = scalar_lea.vmem %s1, 12
  %v1573 = vld [vmem:[%s1572] sm:$0x3]
  %1574 = vmatprep.subr.mxu0 0.0
  %1575 = vmatpush1.msra.mxu0 %v25
  %1576 = vmatprep.subr.mxu0 0.0
  %1577 = vmatpush1.msra.mxu0 %v26
  %1578 = vmatprep.subr.mxu0 0.0
  %1579 = vmatpush1.msra.mxu0 %v27
  %1580 = vmatprep.subr.mxu0 0.0
  %1581 = vmatpush1.msra.mxu0 %v28
  %1582 = vmatprep.subr.mxu0 0.0
  %1583 = vmatpush1.msra.mxu0 0.0
  %1584 = vmatprep.subr.mxu0 0.0
  %1585 = vmatpush1.msra.mxu0 0.0
  %1586 = vmatprep.subr.mxu0 0.0
  %1587 = vmatpush1.msra.mxu0 0.0
  %1588 = vmatprep.subr.mxu0 0.0
  %1589 = vmatpush1.msra.mxu0 0.0
  %1590 = vmatprep.subr.mxu0 0.0
  %1591 = vmatpush1.msra.mxu0 0.0
  %1592 = vmatprep.subr.mxu0 0.0
  %1593 = vmatpush1.msra.mxu0 0.0
  %1594 = vmatprep.subr.mxu0 0.0
  %1595 = vmatpush1.msra.mxu0 0.0
  %1596 = vmatprep.subr.mxu0 0.0
  %1597 = vmatpush1.msra.mxu0 0.0
  %1598 = vmatprep.subr.mxu0 0.0
  %1599 = vmatpush1.msra.mxu0 0.0
  %1600 = vmatprep.subr.mxu0 0.0
  %1601 = vmatpush1.msra.mxu0 0.0
  %1602 = vmatprep.subr.mxu0 0.0
  %1603 = vmatpush1.msra.mxu0 0.0
  %1604 = vmatprep.subr.mxu0 0.0
  %1605 = vmatpush1.msra.mxu0 0.0
  %1606 = vmatprep.subr.mxu0 0.0
  %1607 = vmatpush1.msra.mxu0 0.0
  %1608 = vmatprep.subr.mxu0 0.0
  %1609 = vmatpush1.msra.mxu0 0.0
  %1610 = vmatprep.subr.mxu0 0.0
  %1611 = vmatpush1.msra.mxu0 0.0
  %1612 = vmatprep.subr.mxu0 0.0
  %1613 = vmatpush1.msra.mxu0 0.0
  %1614 = vmatprep.subr.mxu0 0.0
  %1615 = vmatpush1.msra.mxu0 0.0
  %1616 = vmatprep.subr.mxu0 0.0
  %1617 = vmatpush1.msra.mxu0 0.0
  %1618 = vmatprep.subr.mxu0 0.0
  %1619 = vmatpush1.msra.mxu0 0.0
  %1620 = vmatprep.subr.mxu0 0.0
  %1621 = vmatpush1.msra.mxu0 0.0
  %1622 = vmatprep.subr.mxu0 0.0
  %1623 = vmatpush1.msra.mxu0 0.0
  %1624 = vmatprep.subr.mxu0 0.0
  %1625 = vmatpush1.msra.mxu0 0.0
  %1626 = vmatprep.subr.mxu0 0.0
  %1627 = vmatpush1.msra.mxu0 0.0
  %1628 = vmatprep.subr.mxu0 0.0
  %1629 = vmatpush1.msra.mxu0 0.0
  %1630 = vmatprep.subr.mxu0 0.0
  %1631 = vmatpush1.msra.mxu0 0.0
  %1632 = vmatprep.subr.mxu0 0.0
  %1633 = vmatpush1.msra.mxu0 0.0
  %1634 = vmatprep.subr.mxu0 0.0
  %1635 = vmatpush1.msra.mxu0 0.0
  %1636 = vmatprep.subr.mxu0 0.0
  %1637 = vmatpush1.msra.mxu0 0.0
  %1638 = vmatprep.mubr.f32.mxu0 0.0
  %1639 = vmatmul.mubr.f32.gmra.mrb[0].mxu0 %v1493
  %v1640 = vpop.f32.mrb[0].mxu0
  %v1641 = vadd.f32 0.0, %v1640
  %v1642 = vpop.f32.mrb[0].mxu0
  %1643 = vdwg.mxu0
  %v1644 = vadd.f32 %v1573, %v1641
  %v1645 = vxor.u32 %v1644, 2147483648
  %v1646 = vmul.f32 %v1645, 1.442695
  %v1647 = vpow.pop %v1646
  %v1648 = vadd.f32 %v1647, 1.0
  %v1649 = vrcp.pop %v1648
  %v1650 = vmul.f32 1.0, %v1649
  %s1651 = scalar_lea.vmem %s2, 12
  %v1652 = vld [vmem:[%s1651] sm:$0x3]
  %1653 = vmatprep.subr.mxu0 0.0
  %1654 = vmatpush1.msra.mxu0 %v30
  %1655 = vmatprep.subr.mxu0 0.0
  %1656 = vmatpush1.msra.mxu0 %v31
  %1657 = vmatprep.subr.mxu0 0.0
  %1658 = vmatpush1.msra.mxu0 %v32
  %1659 = vmatprep.subr.mxu0 0.0
  %1660 = vmatpush1.msra.mxu0 %v33
  %1661 = vmatprep.subr.mxu0 0.0
  %1662 = vmatpush1.msra.mxu0 0.0
  %1663 = vmatprep.subr.mxu0 0.0
  %1664 = vmatpush1.msra.mxu0 0.0
  %1665 = vmatprep.subr.mxu0 0.0
  %1666 = vmatpush1.msra.mxu0 0.0
  %1667 = vmatprep.subr.mxu0 0.0
  %1668 = vmatpush1.msra.mxu0 0.0
  %1669 = vmatprep.subr.mxu0 0.0
  %1670 = vmatpush1.msra.mxu0 0.0
  %1671 = vmatprep.subr.mxu0 0.0
  %1672 = vmatpush1.msra.mxu0 0.0
  %1673 = vmatprep.subr.mxu0 0.0
  %1674 = vmatpush1.msra.mxu0 0.0
  %1675 = vmatprep.subr.mxu0 0.0
  %1676 = vmatpush1.msra.mxu0 0.0
  %1677 = vmatprep.subr.mxu0 0.0
  %1678 = vmatpush1.msra.mxu0 0.0
  %1679 = vmatprep.subr.mxu0 0.0
  %1680 = vmatpush1.msra.mxu0 0.0
  %1681 = vmatprep.subr.mxu0 0.0
  %1682 = vmatpush1.msra.mxu0 0.0
  %1683 = vmatprep.subr.mxu0 0.0
  %1684 = vmatpush1.msra.mxu0 0.0
  %1685 = vmatprep.subr.mxu0 0.0
  %1686 = vmatpush1.msra.mxu0 0.0
  %1687 = vmatprep.subr.mxu0 0.0
  %1688 = vmatpush1.msra.mxu0 0.0
  %1689 = vmatprep.subr.mxu0 0.0
  %1690 = vmatpush1.msra.mxu0 0.0
  %1691 = vmatprep.subr.mxu0 0.0
  %1692 = vmatpush1.msra.mxu0 0.0
  %1693 = vmatprep.subr.mxu0 0.0
  %1694 = vmatpush1.msra.mxu0 0.0
  %1695 = vmatprep.subr.mxu0 0.0
  %1696 = vmatpush1.msra.mxu0 0.0
  %1697 = vmatprep.subr.mxu0 0.0
  %1698 = vmatpush1.msra.mxu0 0.0
  %1699 = vmatprep.subr.mxu0 0.0
  %1700 = vmatpush1.msra.mxu0 0.0
  %1701 = vmatprep.subr.mxu0 0.0
  %1702 = vmatpush1.msra.mxu0 0.0
  %1703 = vmatprep.subr.mxu0 0.0
  %1704 = vmatpush1.msra.mxu0 0.0
  %1705 = vmatprep.subr.mxu0 0.0
  %1706 = vmatpush1.msra.mxu0 0.0
  %1707 = vmatprep.subr.mxu0 0.0
  %1708 = vmatpush1.msra.mxu0 0.0
  %1709 = vmatprep.subr.mxu0 0.0
  %1710 = vmatpush1.msra.mxu0 0.0
  %1711 = vmatprep.subr.mxu0 0.0
  %1712 = vmatpush1.msra.mxu0 0.0
  %1713 = vmatprep.subr.mxu0 0.0
  %1714 = vmatpush1.msra.mxu0 0.0
  %1715 = vmatprep.subr.mxu0 0.0
  %1716 = vmatpush1.msra.mxu0 0.0
  %1717 = vmatprep.mubr.f32.mxu0 0.0
  %1718 = vmatmul.mubr.f32.gmra.mrb[0].mxu0 %v1493
  %v1719 = vpop.f32.mrb[0].mxu0
  %v1720 = vadd.f32 %v200, %v1719
  %v1721 = vpop.f32.mrb[0].mxu0
  %1722 = vdwg.mxu0
  %v1723 = vmul.f32 %v1571, %v1720
  %v1724 = vadd.f32 %v1652, %v1723
  %v1725 = vtanh.pop %v1724
  %v1726 = vsub.f32 1.0, %v1650
  %v1727 = vmul.f32 %v1726, %v1725
  %v1728 = vmul.f32 %v1650, %v1487
  %v1729 = vadd.f32 %v1727, %v1728
  %v1730 = vtanh.pop %v1729
  %v1731 = vmax.f32 %v1489, %v1730
  %s1732 = scalar_lea.vmem %s0, 14
  %v1733 = vld [vmem:[%s1732] sm:$0x3]
  %v1735 = vsel %vm36, %v1729, 0
  %1737 = vmatprep.subr.mxu0 0.0
  %1738 = vmatpush1.msra.mxu0 %v20
  %1739 = vmatprep.subr.mxu0 0.0
  %1740 = vmatpush1.msra.mxu0 %v21
  %1741 = vmatprep.subr.mxu0 0.0
  %1742 = vmatpush1.msra.mxu0 %v22
  %1743 = vmatprep.subr.mxu0 0.0
  %1744 = vmatpush1.msra.mxu0 %v23
  %1745 = vmatprep.subr.mxu0 0.0
  %1746 = vmatpush1.msra.mxu0 0.0
  %1747 = vmatprep.subr.mxu0 0.0
  %1748 = vmatpush1.msra.mxu0 0.0
  %1749 = vmatprep.subr.mxu0 0.0
  %1750 = vmatpush1.msra.mxu0 0.0
  %1751 = vmatprep.subr.mxu0 0.0
  %1752 = vmatpush1.msra.mxu0 0.0
  %1753 = vmatprep.subr.mxu0 0.0
  %1754 = vmatpush1.msra.mxu0 0.0
  %1755 = vmatprep.subr.mxu0 0.0
  %1756 = vmatpush1.msra.mxu0 0.0
  %1757 = vmatprep.subr.mxu0 0.0
  %1758 = vmatpush1.msra.mxu0 0.0
  %1759 = vmatprep.subr.mxu0 0.0
  %1760 = vmatpush1.msra.mxu0 0.0
  %1761 = vmatprep.subr.mxu0 0.0
  %1762 = vmatpush1.msra.mxu0 0.0
  %1763 = vmatprep.subr.mxu0 0.0
  %1764 = vmatpush1.msra.mxu0 0.0
  %1765 = vmatprep.subr.mxu0 0.0
  %1766 = vmatpush1.msra.mxu0 0.0
  %1767 = vmatprep.subr.mxu0 0.0
  %1768 = vmatpush1.msra.mxu0 0.0
  %1769 = vmatprep.subr.mxu0 0.0
  %1770 = vmatpush1.msra.mxu0 0.0
  %1771 = vmatprep.subr.mxu0 0.0
  %1772 = vmatpush1.msra.mxu0 0.0
  %1773 = vmatprep.subr.mxu0 0.0
  %1774 = vmatpush1.msra.mxu0 0.0
  %1775 = vmatprep.subr.mxu0 0.0
  %1776 = vmatpush1.msra.mxu0 0.0
  %1777 = vmatprep.subr.mxu0 0.0
  %1778 = vmatpush1.msra.mxu0 0.0
  %1779 = vmatprep.subr.mxu0 0.0
  %1780 = vmatpush1.msra.mxu0 0.0
  %1781 = vmatprep.subr.mxu0 0.0
  %1782 = vmatpush1.msra.mxu0 0.0
  %1783 = vmatprep.subr.mxu0 0.0
  %1784 = vmatpush1.msra.mxu0 0.0
  %1785 = vmatprep.subr.mxu0 0.0
  %1786 = vmatpush1.msra.mxu0 0.0
  %1787 = vmatprep.subr.mxu0 0.0
  %1788 = vmatpush1.msra.mxu0 0.0
  %1789 = vmatprep.subr.mxu0 0.0
  %1790 = vmatpush1.msra.mxu0 0.0
  %1791 = vmatprep.subr.mxu0 0.0
  %1792 = vmatpush1.msra.mxu0 0.0
  %1793 = vmatprep.subr.mxu0 0.0
  %1794 = vmatpush1.msra.mxu0 0.0
  %1795 = vmatprep.subr.mxu0 0.0
  %1796 = vmatpush1.msra.mxu0 0.0
  %1797 = vmatprep.subr.mxu0 0.0
  %1798 = vmatpush1.msra.mxu0 0.0
  %1799 = vmatprep.subr.mxu0 0.0
  %1800 = vmatpush1.msra.mxu0 0.0
  %1801 = vmatprep.mubr.f32.mxu0 0.0
  %1802 = vmatmul.mubr.f32.gmra.mrb[0].mxu0 %v1735
  %v1803 = vpop.f32.mrb[0].mxu0
  %v1804 = vadd.f32 0.0, %v1803
  %v1805 = vpop.f32.mrb[0].mxu0
  %1806 = vdwg.mxu0
  %v1807 = vadd.f32 %v1733, %v1804
  %v1808 = vxor.u32 %v1807, 2147483648
  %v1809 = vmul.f32 %v1808, 1.442695
  %v1810 = vpow.pop %v1809
  %v1811 = vadd.f32 %v1810, 1.0
  %v1812 = vrcp.pop %v1811
  %v1813 = vmul.f32 1.0, %v1812
  %s1814 = scalar_lea.vmem %s1, 14
  %v1815 = vld [vmem:[%s1814] sm:$0x3]
  %1816 = vmatprep.subr.mxu0 0.0
  %1817 = vmatpush1.msra.mxu0 %v25
  %1818 = vmatprep.subr.mxu0 0.0
  %1819 = vmatpush1.msra.mxu0 %v26
  %1820 = vmatprep.subr.mxu0 0.0
  %1821 = vmatpush1.msra.mxu0 %v27
  %1822 = vmatprep.subr.mxu0 0.0
  %1823 = vmatpush1.msra.mxu0 %v28
  %1824 = vmatprep.subr.mxu0 0.0
  %1825 = vmatpush1.msra.mxu0 0.0
  %1826 = vmatprep.subr.mxu0 0.0
  %1827 = vmatpush1.msra.mxu0 0.0
  %1828 = vmatprep.subr.mxu0 0.0
  %1829 = vmatpush1.msra.mxu0 0.0
  %1830 = vmatprep.subr.mxu0 0.0
  %1831 = vmatpush1.msra.mxu0 0.0
  %1832 = vmatprep.subr.mxu0 0.0
  %1833 = vmatpush1.msra.mxu0 0.0
  %1834 = vmatprep.subr.mxu0 0.0
  %1835 = vmatpush1.msra.mxu0 0.0
  %1836 = vmatprep.subr.mxu0 0.0
  %1837 = vmatpush1.msra.mxu0 0.0
  %1838 = vmatprep.subr.mxu0 0.0
  %1839 = vmatpush1.msra.mxu0 0.0
  %1840 = vmatprep.subr.mxu0 0.0
  %1841 = vmatpush1.msra.mxu0 0.0
  %1842 = vmatprep.subr.mxu0 0.0
  %1843 = vmatpush1.msra.mxu0 0.0
  %1844 = vmatprep.subr.mxu0 0.0
  %1845 = vmatpush1.msra.mxu0 0.0
  %1846 = vmatprep.subr.mxu0 0.0
  %1847 = vmatpush1.msra.mxu0 0.0
  %1848 = vmatprep.subr.mxu0 0.0
  %1849 = vmatpush1.msra.mxu0 0.0
  %1850 = vmatprep.subr.mxu0 0.0
  %1851 = vmatpush1.msra.mxu0 0.0
  %1852 = vmatprep.subr.mxu0 0.0
  %1853 = vmatpush1.msra.mxu0 0.0
  %1854 = vmatprep.subr.mxu0 0.0
  %1855 = vmatpush1.msra.mxu0 0.0
  %1856 = vmatprep.subr.mxu0 0.0
  %1857 = vmatpush1.msra.mxu0 0.0
  %1858 = vmatprep.subr.mxu0 0.0
  %1859 = vmatpush1.msra.mxu0 0.0
  %1860 = vmatprep.subr.mxu0 0.0
  %1861 = vmatpush1.msra.mxu0 0.0
  %1862 = vmatprep.subr.mxu0 0.0
  %1863 = vmatpush1.msra.mxu0 0.0
  %1864 = vmatprep.subr.mxu0 0.0
  %1865 = vmatpush1.msra.mxu0 0.0
  %1866 = vmatprep.subr.mxu0 0.0
  %1867 = vmatpush1.msra.mxu0 0.0
  %1868 = vmatprep.subr.mxu0 0.0
  %1869 = vmatpush1.msra.mxu0 0.0
  %1870 = vmatprep.subr.mxu0 0.0
  %1871 = vmatpush1.msra.mxu0 0.0
  %1872 = vmatprep.subr.mxu0 0.0
  %1873 = vmatpush1.msra.mxu0 0.0
  %1874 = vmatprep.subr.mxu0 0.0
  %1875 = vmatpush1.msra.mxu0 0.0
  %1876 = vmatprep.subr.mxu0 0.0
  %1877 = vmatpush1.msra.mxu0 0.0
  %1878 = vmatprep.subr.mxu0 0.0
  %1879 = vmatpush1.msra.mxu0 0.0
  %1880 = vmatprep.mubr.f32.mxu0 0.0
  %1881 = vmatmul.mubr.f32.gmra.mrb[0].mxu0 %v1735
  %v1882 = vpop.f32.mrb[0].mxu0
  %v1883 = vadd.f32 0.0, %v1882
  %v1884 = vpop.f32.mrb[0].mxu0
  %1885 = vdwg.mxu0
  %v1886 = vadd.f32 %v1815, %v1883
  %v1887 = vxor.u32 %v1886, 2147483648
  %v1888 = vmul.f32 %v1887, 1.442695
  %v1889 = vpow.pop %v1888
  %v1890 = vadd.f32 %v1889, 1.0
  %v1891 = vrcp.pop %v1890
  %v1892 = vmul.f32 1.0, %v1891
  %s1893 = scalar_lea.vmem %s2, 14
  %v1894 = vld [vmem:[%s1893] sm:$0x3]
  %1895 = vmatprep.subr.mxu0 0.0
  %1896 = vmatpush1.msra.mxu0 %v30
  %1897 = vmatprep.subr.mxu0 0.0
  %1898 = vmatpush1.msra.mxu0 %v31
  %1899 = vmatprep.subr.mxu0 0.0
  %1900 = vmatpush1.msra.mxu0 %v32
  %1901 = vmatprep.subr.mxu0 0.0
  %1902 = vmatpush1.msra.mxu0 %v33
  %1903 = vmatprep.subr.mxu0 0.0
  %1904 = vmatpush1.msra.mxu0 0.0
  %1905 = vmatprep.subr.mxu0 0.0
  %1906 = vmatpush1.msra.mxu0 0.0
  %1907 = vmatprep.subr.mxu0 0.0
  %1908 = vmatpush1.msra.mxu0 0.0
  %1909 = vmatprep.subr.mxu0 0.0
  %1910 = vmatpush1.msra.mxu0 0.0
  %1911 = vmatprep.subr.mxu0 0.0
  %1912 = vmatpush1.msra.mxu0 0.0
  %1913 = vmatprep.subr.mxu0 0.0
  %1914 = vmatpush1.msra.mxu0 0.0
  %1915 = vmatprep.subr.mxu0 0.0
  %1916 = vmatpush1.msra.mxu0 0.0
  %1917 = vmatprep.subr.mxu0 0.0
  %1918 = vmatpush1.msra.mxu0 0.0
  %1919 = vmatprep.subr.mxu0 0.0
  %1920 = vmatpush1.msra.mxu0 0.0
  %1921 = vmatprep.subr.mxu0 0.0
  %1922 = vmatpush1.msra.mxu0 0.0
  %1923 = vmatprep.subr.mxu0 0.0
  %1924 = vmatpush1.msra.mxu0 0.0
  %1925 = vmatprep.subr.mxu0 0.0
  %1926 = vmatpush1.msra.mxu0 0.0
  %1927 = vmatprep.subr.mxu0 0.0
  %1928 = vmatpush1.msra.mxu0 0.0
  %1929 = vmatprep.subr.mxu0 0.0
  %1930 = vmatpush1.msra.mxu0 0.0
  %1931 = vmatprep.subr.mxu0 0.0
  %1932 = vmatpush1.msra.mxu0 0.0
  %1933 = vmatprep.subr.mxu0 0.0
  %1934 = vmatpush1.msra.mxu0 0.0
  %1935 = vmatprep.subr.mxu0 0.0
  %1936 = vmatpush1.msra.mxu0 0.0
  %1937 = vmatprep.subr.mxu0 0.0
  %1938 = vmatpush1.msra.mxu0 0.0
  %1939 = vmatprep.subr.mxu0 0.0
  %1940 = vmatpush1.msra.mxu0 0.0
  %1941 = vmatprep.subr.mxu0 0.0
  %1942 = vmatpush1.msra.mxu0 0.0
  %1943 = vmatprep.subr.mxu0 0.0
  %1944 = vmatpush1.msra.mxu0 0.0
  %1945 = vmatprep.subr.mxu0 0.0
  %1946 = vmatpush1.msra.mxu0 0.0
  %1947 = vmatprep.subr.mxu0 0.0
  %1948 = vmatpush1.msra.mxu0 0.0
  %1949 = vmatprep.subr.mxu0 0.0
  %1950 = vmatpush1.msra.mxu0 0.0
  %1951 = vmatprep.subr.mxu0 0.0
  %1952 = vmatpush1.msra.mxu0 0.0
  %1953 = vmatprep.subr.mxu0 0.0
  %1954 = vmatpush1.msra.mxu0 0.0
  %1955 = vmatprep.subr.mxu0 0.0
  %1956 = vmatpush1.msra.mxu0 0.0
  %1957 = vmatprep.subr.mxu0 0.0
  %1958 = vmatpush1.msra.mxu0 0.0
  %1959 = vmatprep.mubr.f32.mxu0 0.0
  %1960 = vmatmul.mubr.f32.gmra.mrb[0].mxu0 %v1735
  %v1961 = vpop.f32.mrb[0].mxu0
  %v1962 = vadd.f32 %v200, %v1961
  %v1963 = vpop.f32.mrb[0].mxu0
  %1964 = vdwg.mxu0
  %v1965 = vmul.f32 %v1813, %v1962
  %v1966 = vadd.f32 %v1894, %v1965
  %v1967 = vtanh.pop %v1966
  %v1968 = vsub.f32 1.0, %v1892
  %v1969 = vmul.f32 %v1968, %v1967
  %v1970 = vmul.f32 %v1892, %v1729
  %v1971 = vadd.f32 %v1969, %v1970
  %v1972 = vtanh.pop %v1971
  %v1973 = vmax.f32 %v1731, %v1972
  %vm1974 = vcmask 254976
  %1975 = vst.msk [vmem:[%s5] sm:$0x3] %vm1974, %v1973
  // Predicated region
  $region22: #{model_forward.1} parent=0 // pred_check
    _
  $region23: #{model_forward.1} parent=0 // pred_check_branch
    %1977 = sbr.rel (0) target = $region25
  $region24: #{model_forward.1} parent=0 // pred_region
    _
  $region25: #{model_forward.1} parent=0 // pred_fallthru
    _
  // Predicated region
  $region26: #{model_forward.1} parent=0 // pred_check
    _
  $region27: #{model_forward.1} parent=0 // pred_check_branch
    %1979 = sbr.rel (0) target = $region29
  $region28: #{model_forward.1} parent=0 // pred_region
    _
  $region29: #{model_forward.1} parent=0 // pred_fallthru
    _

</llo_original>
